<compile_context>
chip_gen: v6e
topology: v6e:2x2x1
jax: 0.10.0
libtpu: 0.0.40
codegen_flags: <defaults>
</compile_context>

<pallas_src>
import jax
import jax.numpy as jnp
from jax.experimental import pallas as pl
from jax.experimental.pallas import tpu as pltpu

# ---------------- model dimensions (small, consistent with the module) -------------
B = 2                 # batch
H = W = 16            # spatial
CIN = 3               # RGB
CMID = 128            # conv stem channels (full 128-lane vregs)
EMB = 512             # backbone embedding dim (matches fc in_features=512)
NUM_CLASSES = 1024    # lane-aligned stand-in for 10177
KCONV = 9 * CIN       # im2col K = 27
KPAD = 32             # pad K to a sublane-friendly 32
TN = NUM_CLASSES // 2 # class tile per grid step (2 tiles -> both v7x TensorCores)


# ---------------- single fused kernel ------------------------------------------------
def face_fused_kernel(patches_ref, w1_ref, b1_ref, wp_ref, bp_ref,
                      fcwq_ref, fcs_ref, fcb_ref, o_ref):
    # patches_ref: (B*H*W, KPAD) bf16    w1_ref:  (KPAD, CMID) bf16   b1_ref: (1, CMID) f32
    # wp_ref:      (CMID, EMB)   bf16    bp_ref:  (1, EMB)     f32
    # fcwq_ref:    (EMB, TN)     int8    fcs_ref: (1, TN) f32         fcb_ref: (1, TN) f32
    # o_ref:       (B, TN)       f32

    # conv stem as one im2col matmul on the MXU (bf16 inputs, f32 accumulation)
    conv = jnp.dot(patches_ref[...], w1_ref[...],
                   preferred_element_type=jnp.float32)              # (B*H*W, CMID)
    conv = jnp.maximum(conv + b1_ref[...], 0.0)                     # bias + ReLU

    # per-image global average pool: sublane-friendly reshape + single reduction
    pooled = conv.reshape(B, H * W, CMID).sum(axis=1) * (1.0 / (H * W))   # (B, CMID)

    # projection to the 512-d embedding (bf16 weights, f32 accumulation)
    emb = jnp.dot(pooled.astype(wp_ref.dtype), wp_ref[...],
                  preferred_element_type=jnp.float32) + bp_ref[...]       # (B, EMB)

    # fc head: int8 weight tile -> bf16 (values <= 127 exact), dot, dequant in f32 epilogue
    logits = jnp.dot(emb.astype(jnp.bfloat16), fcwq_ref[...].astype(jnp.bfloat16),
                     preferred_element_type=jnp.float32)                  # (B, TN)
    o_ref[...] = (logits * fcs_ref[...] + fcb_ref[...]).astype(o_ref.dtype)


# ---------------- wrapper ------------------------------------------------------------
def _im2col(x_nhwc):
    """(B,H,W,CIN) -> (B*H*W, KPAD) bf16 3x3 / stride-1 / pad-1 patches, K padded 27->32."""
    xp = jnp.pad(x_nhwc, ((0, 0), (1, 1), (1, 1), (0, 0)))
    cols = [xp[:, dy:dy + H, dx:dx + W, :] for dy in range(3) for dx in range(3)]
    patches = jnp.concatenate(cols, axis=-1).reshape(B * H * W, KCONV)
    patches = jnp.pad(patches, ((0, 0), (0, KPAD - KCONV)))
    return patches.astype(jnp.bfloat16)


def face_model_forward(images_nchw, p):
    x = jnp.transpose(images_nchw, (0, 2, 3, 1))                    # NCHW -> NHWC
    patches = _im2col(x)

    rep = lambda j: (0, 0)                                          # replicated small inputs
    tile = lambda j: (0, j)                                         # class-tiled inputs/output

    grid_spec = pltpu.PrefetchScalarGridSpec(
        num_scalar_prefetch=0,
        grid=(NUM_CLASSES // TN,),
        in_specs=[
            pl.BlockSpec((B * H * W, KPAD), rep),     # patches (bf16)
            pl.BlockSpec((KPAD, CMID), rep),          # w1p     (bf16)
            pl.BlockSpec((1, CMID), rep),             # b1      (f32)
            pl.BlockSpec((CMID, EMB), rep),           # wp      (bf16)
            pl.BlockSpec((1, EMB), rep),              # bp      (f32)
            pl.BlockSpec((EMB, TN), tile),            # fc_wq   (int8)
            pl.BlockSpec((1, TN), tile),              # fc_scale(f32)
            pl.BlockSpec((1, TN), tile),              # fc_b    (f32)
        ],
        out_specs=pl.BlockSpec((B, TN), tile),
    )

    return pl.pallas_call(
        face_fused_kernel,
        out_shape=jax.ShapeDtypeStruct((B, NUM_CLASSES), jnp.float32),
        grid_spec=grid_spec,
        compiler_params=pltpu.CompilerParams(
            dimension_semantics=("parallel",)),
        cost_estimate=pl.CostEstimate(
            flops=7_000_000, transcendentals=0, bytes_accessed=740_000),
    )(patches, p["w1p"], p["b1"], p["wp"], p["bp"],
      p["fc_wq"], p["fc_scale"], p["fc_b"])


# ---------------- parameters ---------------------------------------------------------
def init_params(key):
    ks = jax.random.split(key, 6)
    return {
        "w1":   0.1 * jax.random.normal(ks[0], (3, 3, CIN, CMID), jnp.float32),
        "b1":   0.1 * jax.random.normal(ks[1], (1, CMID), jnp.float32),
        "wp":   0.05 * jax.random.normal(ks[2], (CMID, EMB), jnp.float32),
        "bp":   0.05 * jax.random.normal(ks[3], (1, EMB), jnp.float32),
        # fc params mirror nn.Linear(512, num_classes): weight (out, in), bias (out,)
        "fc_w": 0.02 * jax.random.normal(ks[4], (NUM_CLASSES, EMB), jnp.float32),
        "fc_b": 0.02 * jax.random.normal(ks[5], (NUM_CLASSES,), jnp.float32),
    }


def prepare_params(raw):
    """One-time packing (hoisted out of the hot path): flatten/pad conv weight (bf16),
    transpose + int8-quantize fc weight with per-output-channel scales, cast wp to bf16."""
    w1p = jnp.pad(raw["w1"].reshape(KCONV, CMID), ((0, KPAD - KCONV), (0, 0)))
    fc_wt = raw["fc_w"].T                                            # (EMB, NUM_CLASSES)
    amax = jnp.max(jnp.abs(fc_wt), axis=0, keepdims=True)            # per output channel
    fc_scale = jnp.maximum(amax, 1e-8) / 127.0                       # (1, NUM_CLASSES) f32
    fc_wq = jnp.clip(jnp.round(fc_wt / fc_scale), -127, 127).astype(jnp.int8)
    return {
        "w1p":      w1p.astype(jnp.bfloat16),                 # (KPAD, CMID)       bf16
        "b1":       raw["b1"],                                # (1, CMID)          f32
        "wp":       raw["wp"].astype(jnp.bfloat16),           # (CMID, EMB)        bf16
        "bp":       raw["bp"],                                # (1, EMB)           f32
        "fc_wq":    fc_wq,                                    # (EMB, NUM_CLASSES) int8
        "fc_scale": fc_scale,                                 # (1, NUM_CLASSES)   f32
        "fc_b":     raw["fc_b"].reshape(1, NUM_CLASSES),      # (1, NUM_CLASSES)   f32
    }


# ---------------- main ---------------------------------------------------------------
if __name__ == "__main__":
    key = jax.random.PRNGKey(0)
    pkey, xkey = jax.random.split(key)
    params = prepare_params(init_params(pkey))
    images = jax.random.normal(xkey, (B, CIN, H, W), jnp.float32)    # NCHW like PyTorch

    logits = jax.jit(face_model_forward)(images, params)
    jax.block_until_ready(logits)
    assert logits.shape == (B, NUM_CLASSES)
    print("KERNEL_OK")
</pallas_src>

<mosaic_0001>
module attributes {stable_mosaic.version = 11 : i64} {
  func.func @face_fused_kernel(%arg0: i32, %arg1: memref<512x32xbf16, #tpu.memory_space<vmem>>, %arg2: memref<32x128xbf16, #tpu.memory_space<vmem>>, %arg3: memref<1x128xf32, #tpu.memory_space<vmem>>, %arg4: memref<128x512xbf16, #tpu.memory_space<vmem>>, %arg5: memref<1x512xf32, #tpu.memory_space<vmem>>, %arg6: memref<512x512xi8, #tpu.memory_space<vmem>>, %arg7: memref<1x512xf32, #tpu.memory_space<vmem>>, %arg8: memref<1x512xf32, #tpu.memory_space<vmem>>, %arg9: memref<2x512xf32, #tpu.memory_space<vmem>>) attributes {dimension_semantics = [#tpu.dimension_semantics<parallel>], iteration_bounds = array<i64: 2>, scalar_prefetch = 0 : i64, scratch_operands = 0 : i64, tpu.core_type = #tpu.core_type<tc>, window_params = [{pipeline_mode = #tpu.pipeline_mode<synchronous>, transform_indices = @transform_0, window_bounds = array<i64: 512, 32>}, {pipeline_mode = #tpu.pipeline_mode<synchronous>, transform_indices = @transform_1, window_bounds = array<i64: 32, 128>}, {pipeline_mode = #tpu.pipeline_mode<synchronous>, transform_indices = @transform_2, window_bounds = array<i64: 1, 128>}, {pipeline_mode = #tpu.pipeline_mode<synchronous>, transform_indices = @transform_3, window_bounds = array<i64: 128, 512>}, {pipeline_mode = #tpu.pipeline_mode<synchronous>, transform_indices = @transform_4, window_bounds = array<i64: 1, 512>}, {transform_indices = @transform_5, window_bounds = array<i64: 512, 512>}, {transform_indices = @transform_6, window_bounds = array<i64: 1, 512>}, {transform_indices = @transform_7, window_bounds = array<i64: 1, 512>}, {transform_indices = @transform_8, window_bounds = array<i64: 2, 512>}]} {
    %c0 = arith.constant 0 : index
    %c0_0 = arith.constant 0 : index
    %0 = vector.load %arg1[%c0, %c0_0] : memref<512x32xbf16, #tpu.memory_space<vmem>>, vector<512x32xbf16>
    %c0_1 = arith.constant 0 : index
    %c0_2 = arith.constant 0 : index
    %1 = vector.load %arg2[%c0_1, %c0_2] : memref<32x128xbf16, #tpu.memory_space<vmem>>, vector<32x128xbf16>
    %cst = arith.constant dense<0.000000e+00> : vector<512x128xf32>
    %2 = tpu.matmul %0, %1, %cst {dimension_numbers = #tpu.dot_dimension_numbers<[1], [0], [0], [1], [0, 0, 1, 1], [], []>} : vector<512x32xbf16>, vector<32x128xbf16>, vector<512x128xf32> -> vector<512x128xf32>
    %c0_3 = arith.constant 0 : index
    %c0_4 = arith.constant 0 : index
    %3 = vector.load %arg3[%c0_3, %c0_4] : memref<1x128xf32, #tpu.memory_space<vmem>>, vector<1x128xf32>
    %4 = vector.broadcast %3 : vector<1x128xf32> to vector<512x128xf32>
    %5 = arith.addf %2, %4 : vector<512x128xf32>
    %cst_5 = arith.constant 0.000000e+00 : f32
    %6 = vector.broadcast %cst_5 : f32 to vector<512x128xf32>
    %7 = arith.maximumf %5, %6 : vector<512x128xf32>
    %8 = vector.shape_cast %7 : vector<512x128xf32> to vector<2x256x128xf32>
    %cst_6 = arith.constant dense<0.000000e+00> : vector<2x128xf32>
    %9 = vector.multi_reduction <add>, %8, %cst_6 [1] : vector<2x256x128xf32> to vector<2x128xf32>
    %cst_7 = arith.constant 3.906250e-03 : f32
    %10 = vector.broadcast %cst_7 : f32 to vector<2x128xf32>
    %11 = arith.mulf %9, %10 : vector<2x128xf32>
    %12 = arith.truncf %11 : vector<2x128xf32> to vector<2x128xbf16>
    %c0_8 = arith.constant 0 : index
    %c0_9 = arith.constant 0 : index
    %13 = vector.load %arg4[%c0_8, %c0_9] : memref<128x512xbf16, #tpu.memory_space<vmem>>, vector<128x512xbf16>
    %cst_10 = arith.constant dense<0.000000e+00> : vector<2x512xf32>
    %14 = tpu.matmul %12, %13, %cst_10 {dimension_numbers = #tpu.dot_dimension_numbers<[1], [0], [0], [1], [0, 0, 1, 1], [], []>} : vector<2x128xbf16>, vector<128x512xbf16>, vector<2x512xf32> -> vector<2x512xf32>
    %c0_11 = arith.constant 0 : index
    %c0_12 = arith.constant 0 : index
    %15 = vector.load %arg5[%c0_11, %c0_12] : memref<1x512xf32, #tpu.memory_space<vmem>>, vector<1x512xf32>
    %16 = vector.broadcast %15 : vector<1x512xf32> to vector<2x512xf32>
    %17 = arith.addf %14, %16 : vector<2x512xf32>
    %18 = arith.truncf %17 : vector<2x512xf32> to vector<2x512xbf16>
    %c0_13 = arith.constant 0 : index
    %c0_14 = arith.constant 0 : index
    %19 = vector.load %arg6[%c0_13, %c0_14] : memref<512x512xi8, #tpu.memory_space<vmem>>, vector<512x512xi8>
    %20 = arith.sitofp %19 : vector<512x512xi8> to vector<512x512xbf16>
    %cst_15 = arith.constant dense<0.000000e+00> : vector<2x512xf32>
    %21 = tpu.matmul %18, %20, %cst_15 {dimension_numbers = #tpu.dot_dimension_numbers<[1], [0], [0], [1], [0, 0, 1, 1], [], []>} : vector<2x512xbf16>, vector<512x512xbf16>, vector<2x512xf32> -> vector<2x512xf32>
    %c0_16 = arith.constant 0 : index
    %c0_17 = arith.constant 0 : index
    %22 = vector.load %arg7[%c0_16, %c0_17] : memref<1x512xf32, #tpu.memory_space<vmem>>, vector<1x512xf32>
    %23 = vector.broadcast %22 : vector<1x512xf32> to vector<2x512xf32>
    %24 = arith.mulf %21, %23 : vector<2x512xf32>
    %c0_18 = arith.constant 0 : index
    %c0_19 = arith.constant 0 : index
    %25 = vector.load %arg8[%c0_18, %c0_19] : memref<1x512xf32, #tpu.memory_space<vmem>>, vector<1x512xf32>
    %26 = vector.broadcast %25 : vector<1x512xf32> to vector<2x512xf32>
    %27 = arith.addf %24, %26 : vector<2x512xf32>
    %c0_20 = arith.constant 0 : index
    %c0_21 = arith.constant 0 : index
    %28 = vector.load %arg9[%c0_20, %c0_21] : memref<2x512xf32, #tpu.memory_space<vmem>>, vector<2x512xf32>
    tpu.vector_store %arg9[%c0_20, %c0_21], %27 {strides = array<i32>} : memref<2x512xf32, #tpu.memory_space<vmem>>, vector<2x512xf32>,
    return
  }
  func.func @transform_0(%arg0: i32) -> (i32, i32) {
    %c0_i32 = arith.constant 0 : i32
    %c0_i32_0 = arith.constant 0 : i32
    %c0_i32_1 = arith.constant 0 : i32
    return %c0_i32, %c0_i32_0 : i32, i32
  }
  func.func @transform_1(%arg0: i32) -> (i32, i32) {
    %c0_i32 = arith.constant 0 : i32
    %c0_i32_0 = arith.constant 0 : i32
    %c0_i32_1 = arith.constant 0 : i32
    return %c0_i32, %c0_i32_0 : i32, i32
  }
  func.func @transform_2(%arg0: i32) -> (i32, i32) {
    %c0_i32 = arith.constant 0 : i32
    %c0_i32_0 = arith.constant 0 : i32
    %c0_i32_1 = arith.constant 0 : i32
    return %c0_i32, %c0_i32_0 : i32, i32
  }
  func.func @transform_3(%arg0: i32) -> (i32, i32) {
    %c0_i32 = arith.constant 0 : i32
    %c0_i32_0 = arith.constant 0 : i32
    %c0_i32_1 = arith.constant 0 : i32
    return %c0_i32, %c0_i32_0 : i32, i32
  }
  func.func @transform_4(%arg0: i32) -> (i32, i32) {
    %c0_i32 = arith.constant 0 : i32
    %c0_i32_0 = arith.constant 0 : i32
    %c0_i32_1 = arith.constant 0 : i32
    return %c0_i32, %c0_i32_0 : i32, i32
  }
  func.func @transform_5(%arg0: i32) -> (i32, i32) {
    %c0_i32 = arith.constant 0 : i32
    %c0_i32_0 = arith.constant 0 : i32
    return %c0_i32, %arg0 : i32, i32
  }
  func.func @transform_6(%arg0: i32) -> (i32, i32) {
    %c0_i32 = arith.constant 0 : i32
    %c0_i32_0 = arith.constant 0 : i32
    return %c0_i32, %arg0 : i32, i32
  }
  func.func @transform_7(%arg0: i32) -> (i32, i32) {
    %c0_i32 = arith.constant 0 : i32
    %c0_i32_0 = arith.constant 0 : i32
    return %c0_i32, %arg0 : i32, i32
  }
  func.func @transform_8(%arg0: i32) -> (i32, i32) {
    %c0_i32 = arith.constant 0 : i32
    %c0_i32_0 = arith.constant 0 : i32
    return %c0_i32, %arg0 : i32, i32
  }
}

</mosaic_0001>

<llo_original>
// kernel: face_model_forward.1
$region0: #{face_model_forward.1}
  #allocation0 [shape = 'u32[]', space=smem, size = 0x4, offset = 0x4, fixed_abs, tag = 'smem constant byte address 0x4 - core index']
  #allocation1 [shape = 'u32[144,128]{1,0:T(1,128)}', space=vmem, size = 0x12000, scoped, tag = 'internal scratch']
  %s0 = inlined_call_operand.vmem [shape: bf16[512,32], index: 0, kind: input, shape index: {}]
  %s1 = inlined_call_operand.vmem [shape: bf16[32,128], index: 1, kind: input, shape index: {}]
  %s2 = inlined_call_operand.vmem [shape: f32[1,128], index: 2, kind: input, shape index: {}]
  %s3 = inlined_call_operand.vmem [shape: bf16[128,512], index: 3, kind: input, shape index: {}]
  %s4 = inlined_call_operand.vmem [shape: f32[1,512], index: 4, kind: input, shape index: {}]
  %s5 = inlined_call_operand.vmem [shape: s8[512,1024], index: 5, kind: input, shape index: {}]
  %s6 = inlined_call_operand.vmem [shape: f32[1,1024], index: 6, kind: input, shape index: {}]
  %s7 = inlined_call_operand.vmem [shape: f32[1,1024], index: 7, kind: input, shape index: {}]
  %s8 = inlined_call_operand.hbm [shape: f32[2,1024], index: 8, kind: output, shape index: {}]
  %s9 = sld [smem:[#allocation0]]
  $region88: #{face_model_forward.1} parent=0
    _
  %s11 = ssub.s32 1, %s9
  %s12 = scalar_select 0, %s11, %s9
  $region1: #{face_model_forward.1} parent=0
    #allocation2 [shape = 'u8[524288]{0}', space=vmem, size = 0x80000, scoped, tag = 'input window, operand 5']
    #allocation3 [shape = 'u8[8192]{0}', space=vmem, size = 0x2000, scoped, tag = 'output window, operand 0']
    #allocation4 [shape = 's32[2]{0}', space=sflag, size = 0x8, scoped, tag = 'scoped memory for face_model_forward.1']
    %13 = vsyncpa [#allocation4], 0
    %s14 = scalar_lea.sflag [#allocation4], 1
    %15 = vsyncpa %s14, 0
    loop: start=0, step=1, limit=4
    $region2: #{face_model_forward.1} parent=1 // loop_pre_header
      _
    $region3: #{face_model_forward.1} parent=1 // loop_header
      %s17 = sphi 0, %s21
      %p18 = scmp.ge.s32.totalorder %s17, 4
      %s25 = sphi 0, %s25
      %s27 = sphi 0, %s25
      %s28 = sphi 0, %s27
      %s42 = sphi 0, %s28
      %s46 = sphi 0, %s46
      %s48 = sphi 0, %s46
      %s49 = sphi 0, %s48
      %s63 = sphi 0, %s49
      %s67 = sphi 0, %s67
      %s69 = sphi 0, %s67
      %s70 = sphi 0, %s69
      %s84 = sphi 0, %s70
      %s88 = sphi 0, %s88
      %s90 = sphi 0, %s88
      %s91 = sphi 0, %s90
      %s105 = sphi 0, %s91
      %s109 = sphi 0, %s109
      %s111 = sphi 0, %s109
      %s112 = sphi 0, %s111
      %s126 = sphi 0, %s112
      %s132 = sphi 0, %s134
      %s135 = sphi 0, %s132
      %s136 = sphi 0, %s135
      %s152 = sphi 0, %s136
      %s158 = sphi 0, %s160
      %s161 = sphi 0, %s158
      %s162 = sphi 0, %s161
      %s178 = sphi 0, %s162
      %s184 = sphi 0, %s186
      %s187 = sphi 0, %s184
      %s188 = sphi 0, %s187
      %s204 = sphi 0, %s188
      %s210 = sphi 0, %s212
      %s213 = sphi 0, %s210
      %s214 = sphi 0, %s213
      %s230 = sphi 0, %s214
    $region4: #{face_model_forward.1} parent=1 // loop_header_branch
      %20 = sbr.rel (%p18) target = $region8
    $region5: #{face_model_forward.1} parent=1 // loop_body
      %s22 = ssub.s32 %s17, 1
      %s23 = ssub.s32 %s17, 2
      %s24 = sadd.s32 %s17, 1
      %s26 = sadd.s32 %s25, 1
      %p29 = scmp.eq.s32.totalorder %s17, 1
      %p30 = scmp.ne.s32.totalorder %s25, %s27
      %p31 = scmp.eq.s32.totalorder %s17, 0
      %p32 = por %p30, %p31
      %p33 = scmp.ne.s32.totalorder %s25, %s27
      %p34 = scmp.eq.s32.totalorder %s22, 1
      %p35 = por %p33, %p34
      %p36 = scmp.ne.s32.totalorder %s27, %s28
      %p37 = scmp.eq.s32.totalorder %s22, 0
      %p38 = por %p36, %p37
      %p39 = scmp.ne.s32.totalorder %s27, %s28
      %p40 = scmp.eq.s32.totalorder %s23, 1
      %p41 = por %p39, %p40
      %p43 = scmp.ne.s32.totalorder %s28, %s42
      %p44 = scmp.eq.s32.totalorder %s23, 0
      %p45 = por %p43, %p44
      %s47 = sadd.s32 %s46, 1
      %p50 = scmp.eq.s32.totalorder %s17, 1
      %p51 = scmp.ne.s32.totalorder %s46, %s48
      %p52 = scmp.eq.s32.totalorder %s17, 0
      %p53 = por %p51, %p52
      %p54 = scmp.ne.s32.totalorder %s46, %s48
      %p55 = scmp.eq.s32.totalorder %s22, 1
      %p56 = por %p54, %p55
      %p57 = scmp.ne.s32.totalorder %s48, %s49
      %p58 = scmp.eq.s32.totalorder %s22, 0
      %p59 = por %p57, %p58
      %p60 = scmp.ne.s32.totalorder %s48, %s49
      %p61 = scmp.eq.s32.totalorder %s23, 1
      %p62 = por %p60, %p61
      %p64 = scmp.ne.s32.totalorder %s49, %s63
      %p65 = scmp.eq.s32.totalorder %s23, 0
      %p66 = por %p64, %p65
      %s68 = sadd.s32 %s67, 1
      %p71 = scmp.eq.s32.totalorder %s17, 1
      %p72 = scmp.ne.s32.totalorder %s67, %s69
      %p73 = scmp.eq.s32.totalorder %s17, 0
      %p74 = por %p72, %p73
      %p75 = scmp.ne.s32.totalorder %s67, %s69
      %p76 = scmp.eq.s32.totalorder %s22, 1
      %p77 = por %p75, %p76
      %p78 = scmp.ne.s32.totalorder %s69, %s70
      %p79 = scmp.eq.s32.totalorder %s22, 0
      %p80 = por %p78, %p79
      %p81 = scmp.ne.s32.totalorder %s69, %s70
      %p82 = scmp.eq.s32.totalorder %s23, 1
      %p83 = por %p81, %p82
      %p85 = scmp.ne.s32.totalorder %s70, %s84
      %p86 = scmp.eq.s32.totalorder %s23, 0
      %p87 = por %p85, %p86
      %s89 = sadd.s32 %s88, 1
      %p92 = scmp.eq.s32.totalorder %s17, 1
      %p93 = scmp.ne.s32.totalorder %s88, %s90
      %p94 = scmp.eq.s32.totalorder %s17, 0
      %p95 = por %p93, %p94
      %p96 = scmp.ne.s32.totalorder %s88, %s90
      %p97 = scmp.eq.s32.totalorder %s22, 1
      %p98 = por %p96, %p97
      %p99 = scmp.ne.s32.totalorder %s90, %s91
      %p100 = scmp.eq.s32.totalorder %s22, 0
      %p101 = por %p99, %p100
      %p102 = scmp.ne.s32.totalorder %s90, %s91
      %p103 = scmp.eq.s32.totalorder %s23, 1
      %p104 = por %p102, %p103
      %p106 = scmp.ne.s32.totalorder %s91, %s105
      %p107 = scmp.eq.s32.totalorder %s23, 0
      %p108 = por %p106, %p107
      %s110 = sadd.s32 %s109, 1
      %p113 = scmp.eq.s32.totalorder %s17, 1
      %p114 = scmp.ne.s32.totalorder %s109, %s111
      %p115 = scmp.eq.s32.totalorder %s17, 0
      %p116 = por %p114, %p115
      %p117 = scmp.ne.s32.totalorder %s109, %s111
      %p118 = scmp.eq.s32.totalorder %s22, 1
      %p119 = por %p117, %p118
      %p120 = scmp.ne.s32.totalorder %s111, %s112
      %p121 = scmp.eq.s32.totalorder %s22, 0
      %p122 = por %p120, %p121
      %p123 = scmp.ne.s32.totalorder %s111, %s112
      %p124 = scmp.eq.s32.totalorder %s23, 1
      %p125 = por %p123, %p124
      %p127 = scmp.ne.s32.totalorder %s112, %s126
      %p128 = scmp.eq.s32.totalorder %s23, 0
      %p129 = por %p127, %p128
      %s130 = ssub.s32 %s17, %s24
      %p131 = scmp.eq.s32.totalorder %s130, 0
      %s133 = sadd.s32 %s132, 1
      %s134 = scalar_select %p131, %s132, %s133
      %p137 = pneg %p131
      %p138 = scmp.eq.s32.totalorder %s17, 1
      %p139 = por %p137, %p138
      %p140 = scmp.ne.s32.totalorder %s132, %s135
      %p141 = scmp.eq.s32.totalorder %s17, 0
      %p142 = por %p140, %p141
      %p143 = scmp.ne.s32.totalorder %s132, %s135
      %p144 = scmp.eq.s32.totalorder %s22, 1
      %p145 = por %p143, %p144
      %p146 = scmp.ne.s32.totalorder %s135, %s136
      %p147 = scmp.eq.s32.totalorder %s22, 0
      %p148 = por %p146, %p147
      %p149 = scmp.ne.s32.totalorder %s135, %s136
      %p150 = scmp.eq.s32.totalorder %s23, 1
      %p151 = por %p149, %p150
      %p153 = scmp.ne.s32.totalorder %s136, %s152
      %p154 = scmp.eq.s32.totalorder %s23, 0
      %p155 = por %p153, %p154
      %s156 = ssub.s32 %s17, %s24
      %p157 = scmp.eq.s32.totalorder %s156, 0
      %s159 = sadd.s32 %s158, 1
      %s160 = scalar_select %p157, %s158, %s159
      %p163 = pneg %p157
      %p164 = scmp.eq.s32.totalorder %s17, 1
      %p165 = por %p163, %p164
      %p166 = scmp.ne.s32.totalorder %s158, %s161
      %p167 = scmp.eq.s32.totalorder %s17, 0
      %p168 = por %p166, %p167
      %p169 = scmp.ne.s32.totalorder %s158, %s161
      %p170 = scmp.eq.s32.totalorder %s22, 1
      %p171 = por %p169, %p170
      %p172 = scmp.ne.s32.totalorder %s161, %s162
      %p173 = scmp.eq.s32.totalorder %s22, 0
      %p174 = por %p172, %p173
      %p175 = scmp.ne.s32.totalorder %s161, %s162
      %p176 = scmp.eq.s32.totalorder %s23, 1
      %p177 = por %p175, %p176
      %p179 = scmp.ne.s32.totalorder %s162, %s178
      %p180 = scmp.eq.s32.totalorder %s23, 0
      %p181 = por %p179, %p180
      %s182 = ssub.s32 %s17, %s24
      %p183 = scmp.eq.s32.totalorder %s182, 0
      %s185 = sadd.s32 %s184, 1
      %s186 = scalar_select %p183, %s184, %s185
      %p189 = pneg %p183
      %p190 = scmp.eq.s32.totalorder %s17, 1
      %p191 = por %p189, %p190
      %p192 = scmp.ne.s32.totalorder %s184, %s187
      %p193 = scmp.eq.s32.totalorder %s17, 0
      %p194 = por %p192, %p193
      %p195 = scmp.ne.s32.totalorder %s184, %s187
      %p196 = scmp.eq.s32.totalorder %s22, 1
      %p197 = por %p195, %p196
      %p198 = scmp.ne.s32.totalorder %s187, %s188
      %p199 = scmp.eq.s32.totalorder %s22, 0
      %p200 = por %p198, %p199
      %p201 = scmp.ne.s32.totalorder %s187, %s188
      %p202 = scmp.eq.s32.totalorder %s23, 1
      %p203 = por %p201, %p202
      %p205 = scmp.ne.s32.totalorder %s188, %s204
      %p206 = scmp.eq.s32.totalorder %s23, 0
      %p207 = por %p205, %p206
      %s208 = ssub.s32 %s17, %s24
      %p209 = scmp.eq.s32.totalorder %s208, 0
      %s211 = sadd.s32 %s210, 1
      %s212 = scalar_select %p209, %s210, %s211
      %p215 = pneg %p209
      %p216 = scmp.eq.s32.totalorder %s17, 1
      %p217 = por %p215, %p216
      %p218 = scmp.ne.s32.totalorder %s210, %s213
      %p219 = scmp.eq.s32.totalorder %s17, 0
      %p220 = por %p218, %p219
      %p221 = scmp.ne.s32.totalorder %s210, %s213
      %p222 = scmp.eq.s32.totalorder %s22, 1
      %p223 = por %p221, %p222
      %p224 = scmp.ne.s32.totalorder %s213, %s214
      %p225 = scmp.eq.s32.totalorder %s22, 0
      %p226 = por %p224, %p225
      %p227 = scmp.ne.s32.totalorder %s213, %s214
      %p228 = scmp.eq.s32.totalorder %s23, 1
      %p229 = por %p227, %p228
      %p231 = scmp.ne.s32.totalorder %s214, %s230
      %p232 = scmp.eq.s32.totalorder %s23, 0
      %p233 = por %p231, %p232
      %p234 = scmp.le.s32.totalorder 1, %s17
      %p235 = scmp.lt.s32.totalorder %s17, 3
      %p236 = pnand %p234, %p235
      %p237 = pneg %p236
      // Predicated region
      $region9: #{face_model_forward.1} parent=5 // pred_check
        _
      $region10: #{face_model_forward.1} parent=5 // pred_check_branch
        %239 = sbr.rel (%p236) target = $region12
      $region11: #{face_model_forward.1} parent=5 // pred_region
        %s240 = ssub.s32 %s17, 1
        // Predicated region
        $region13: #{face_model_forward.1} parent=11 // pred_check
          %p241 = pneg %p38
        $region14: #{face_model_forward.1} parent=11 // pred_check_branch
          %243 = sbr.rel (%p241) target = $region16
        $region15: #{face_model_forward.1} parent=11 // pred_region
          _
        $region16: #{face_model_forward.1} parent=11 // pred_fallthru
          _
        // Predicated region
        $region17: #{face_model_forward.1} parent=11 // pred_check
          %p244 = pneg %p59
        $region18: #{face_model_forward.1} parent=11 // pred_check_branch
          %246 = sbr.rel (%p244) target = $region20
        $region19: #{face_model_forward.1} parent=11 // pred_region
          _
        $region20: #{face_model_forward.1} parent=11 // pred_fallthru
          _
        // Predicated region
        $region21: #{face_model_forward.1} parent=11 // pred_check
          %p247 = pneg %p80
        $region22: #{face_model_forward.1} parent=11 // pred_check_branch
          %249 = sbr.rel (%p247) target = $region24
        $region23: #{face_model_forward.1} parent=11 // pred_region
          _
        $region24: #{face_model_forward.1} parent=11 // pred_fallthru
          _
        // Predicated region
        $region25: #{face_model_forward.1} parent=11 // pred_check
          %p250 = pneg %p101
        $region26: #{face_model_forward.1} parent=11 // pred_check_branch
          %252 = sbr.rel (%p250) target = $region28
        $region27: #{face_model_forward.1} parent=11 // pred_region
          _
        $region28: #{face_model_forward.1} parent=11 // pred_fallthru
          _
        // Predicated region
        $region29: #{face_model_forward.1} parent=11 // pred_check
          %p253 = pneg %p122
        $region30: #{face_model_forward.1} parent=11 // pred_check_branch
          %255 = sbr.rel (%p253) target = $region32
        $region31: #{face_model_forward.1} parent=11 // pred_region
          _
        $region32: #{face_model_forward.1} parent=11 // pred_fallthru
          _
      $region12: #{face_model_forward.1} parent=5 // pred_fallthru
        _
      %p256 = scmp.lt.s32.totalorder %s17, 2
      // Predicated region
      $region33: #{face_model_forward.1} parent=5 // pred_check
        %p257 = pneg %p256
      $region34: #{face_model_forward.1} parent=5 // pred_check_branch
        %259 = sbr.rel (%p257) target = $region36
      $region35: #{face_model_forward.1} parent=5 // pred_region
        // Predicated region
        $region37: #{face_model_forward.1} parent=35 // pred_check
          %p260 = pneg %p142
        $region38: #{face_model_forward.1} parent=35 // pred_check_branch
          %262 = sbr.rel (%p260) target = $region40
        $region39: #{face_model_forward.1} parent=35 // pred_region
          %s263 = sand.u32 %s132, 1
          %s264 = sand.u32 %s132, 1
          %s265 = smul.addr %s264, 512
          %s266 = scalar_lea.vmem [#allocation2], %s265
          %s267 = smul.u32 4, %s17
          %s268 = smul.addr %s267, 8
          %s269 = scalar_lea.vmem %s5, %s268
          // Predicated region
          $region41: #{face_model_forward.1} parent=39 // pred_check
            _
          $region42: #{face_model_forward.1} parent=39 // pred_check_branch
            %271 = sbr.rel (0) target = $region44
          $region43: #{face_model_forward.1} parent=39 // pred_region
            // Predicated region
            $region45: #{face_model_forward.1} parent=43 // pred_check
              _
            $region46: #{face_model_forward.1} parent=43 // pred_check_branch
              %273 = sbr.rel (0) target = $region48
            $region47: #{face_model_forward.1} parent=43 // pred_region
              loop: start=0, step=1, limit=1
              $region49: #{face_model_forward.1} parent=47 // loop_pre_header
                _
              $region50: #{face_model_forward.1} parent=47 // loop_header
                %s275 = sphi 0, %s279
                %p276 = scmp.ge.s32.totalorder %s275, 1
                %s280 = sphi %s269, %s269
                %s281 = sphi %s266, %s266
              $region51: #{face_model_forward.1} parent=47 // loop_header_branch
                %278 = sbr.rel (%p276) target = $region55
              $region52: #{face_model_forward.1} parent=47 // loop_body
                %v282 = vld [vmem:[%s280] sm:$0xff]
                %283 = vst [vmem:[%s281] sm:$0xff] %v282
                %v284 = vld [vmem:[%s280 + $0x8] sm:$0xff]
                %285 = vst [vmem:[%s281 + $0x8] sm:$0xff] %v284
                %v286 = vld [vmem:[%s280 + $0x10] sm:$0xff]
                %287 = vst [vmem:[%s281 + $0x10] sm:$0xff] %v286
                %v288 = vld [vmem:[%s280 + $0x18] sm:$0xff]
                %289 = vst [vmem:[%s281 + $0x18] sm:$0xff] %v288
                %v290 = vld [vmem:[%s280 + $0x40] sm:$0xff]
                %291 = vst [vmem:[%s281 + $0x20] sm:$0xff] %v290
                %v292 = vld [vmem:[%s280 + $0x48] sm:$0xff]
                %293 = vst [vmem:[%s281 + $0x28] sm:$0xff] %v292
                %v294 = vld [vmem:[%s280 + $0x50] sm:$0xff]
                %295 = vst [vmem:[%s281 + $0x30] sm:$0xff] %v294
                %v296 = vld [vmem:[%s280 + $0x58] sm:$0xff]
                %297 = vst [vmem:[%s281 + $0x38] sm:$0xff] %v296
                %v298 = vld [vmem:[%s280 + $0x80] sm:$0xff]
                %299 = vst [vmem:[%s281 + $0x40] sm:$0xff] %v298
                %v300 = vld [vmem:[%s280 + $0x88] sm:$0xff]
                %301 = vst [vmem:[%s281 + $0x48] sm:$0xff] %v300
                %v302 = vld [vmem:[%s280 + $0x90] sm:$0xff]
                %303 = vst [vmem:[%s281 + $0x50] sm:$0xff] %v302
                %v304 = vld [vmem:[%s280 + $0x98] sm:$0xff]
                %305 = vst [vmem:[%s281 + $0x58] sm:$0xff] %v304
                %v306 = vld [vmem:[%s280 + $0xc0] sm:$0xff]
                %307 = vst [vmem:[%s281 + $0x60] sm:$0xff] %v306
                %v308 = vld [vmem:[%s280 + $0xc8] sm:$0xff]
                %309 = vst [vmem:[%s281 + $0x68] sm:$0xff] %v308
                %v310 = vld [vmem:[%s280 + $0xd0] sm:$0xff]
                %311 = vst [vmem:[%s281 + $0x70] sm:$0xff] %v310
                %v312 = vld [vmem:[%s280 + $0xd8] sm:$0xff]
                %313 = vst [vmem:[%s281 + $0x78] sm:$0xff] %v312
                %v314 = vld [vmem:[%s280 + $0x100] sm:$0xff]
                %315 = vst [vmem:[%s281 + $0x80] sm:$0xff] %v314
                %v316 = vld [vmem:[%s280 + $0x108] sm:$0xff]
                %317 = vst [vmem:[%s281 + $0x88] sm:$0xff] %v316
                %v318 = vld [vmem:[%s280 + $0x110] sm:$0xff]
                %319 = vst [vmem:[%s281 + $0x90] sm:$0xff] %v318
                %v320 = vld [vmem:[%s280 + $0x118] sm:$0xff]
                %321 = vst [vmem:[%s281 + $0x98] sm:$0xff] %v320
                %v322 = vld [vmem:[%s280 + $0x140] sm:$0xff]
                %323 = vst [vmem:[%s281 + $0xa0] sm:$0xff] %v322
                %v324 = vld [vmem:[%s280 + $0x148] sm:$0xff]
                %325 = vst [vmem:[%s281 + $0xa8] sm:$0xff] %v324
                %v326 = vld [vmem:[%s280 + $0x150] sm:$0xff]
                %327 = vst [vmem:[%s281 + $0xb0] sm:$0xff] %v326
                %v328 = vld [vmem:[%s280 + $0x158] sm:$0xff]
                %329 = vst [vmem:[%s281 + $0xb8] sm:$0xff] %v328
                %v330 = vld [vmem:[%s280 + $0x180] sm:$0xff]
                %331 = vst [vmem:[%s281 + $0xc0] sm:$0xff] %v330
                %v332 = vld [vmem:[%s280 + $0x188] sm:$0xff]
                %333 = vst [vmem:[%s281 + $0xc8] sm:$0xff] %v332
                %v334 = vld [vmem:[%s280 + $0x190] sm:$0xff]
                %335 = vst [vmem:[%s281 + $0xd0] sm:$0xff] %v334
                %v336 = vld [vmem:[%s280 + $0x198] sm:$0xff]
                %337 = vst [vmem:[%s281 + $0xd8] sm:$0xff] %v336
                %v338 = vld [vmem:[%s280 + $0x1c0] sm:$0xff]
                %339 = vst [vmem:[%s281 + $0xe0] sm:$0xff] %v338
                %v340 = vld [vmem:[%s280 + $0x1c8] sm:$0xff]
                %341 = vst [vmem:[%s281 + $0xe8] sm:$0xff] %v340
                %v342 = vld [vmem:[%s280 + $0x1d0] sm:$0xff]
                %343 = vst [vmem:[%s281 + $0xf0] sm:$0xff] %v342
                %v344 = vld [vmem:[%s280 + $0x1d8] sm:$0xff]
                %345 = vst [vmem:[%s281 + $0xf8] sm:$0xff] %v344
                %v346 = vld [vmem:[%s280 + $0x200] sm:$0xff]
                %347 = vst [vmem:[%s281 + $0x100] sm:$0xff] %v346
                %v348 = vld [vmem:[%s280 + $0x208] sm:$0xff]
                %349 = vst [vmem:[%s281 + $0x108] sm:$0xff] %v348
                %v350 = vld [vmem:[%s280 + $0x210] sm:$0xff]
                %351 = vst [vmem:[%s281 + $0x110] sm:$0xff] %v350
                %v352 = vld [vmem:[%s280 + $0x218] sm:$0xff]
                %353 = vst [vmem:[%s281 + $0x118] sm:$0xff] %v352
                %v354 = vld [vmem:[%s280 + $0x240] sm:$0xff]
                %355 = vst [vmem:[%s281 + $0x120] sm:$0xff] %v354
                %v356 = vld [vmem:[%s280 + $0x248] sm:$0xff]
                %357 = vst [vmem:[%s281 + $0x128] sm:$0xff] %v356
                %v358 = vld [vmem:[%s280 + $0x250] sm:$0xff]
                %359 = vst [vmem:[%s281 + $0x130] sm:$0xff] %v358
                %v360 = vld [vmem:[%s280 + $0x258] sm:$0xff]
                %361 = vst [vmem:[%s281 + $0x138] sm:$0xff] %v360
                %v362 = vld [vmem:[%s280 + $0x280] sm:$0xff]
                %363 = vst [vmem:[%s281 + $0x140] sm:$0xff] %v362
                %v364 = vld [vmem:[%s280 + $0x288] sm:$0xff]
                %365 = vst [vmem:[%s281 + $0x148] sm:$0xff] %v364
                %v366 = vld [vmem:[%s280 + $0x290] sm:$0xff]
                %367 = vst [vmem:[%s281 + $0x150] sm:$0xff] %v366
                %v368 = vld [vmem:[%s280 + $0x298] sm:$0xff]
                %369 = vst [vmem:[%s281 + $0x158] sm:$0xff] %v368
                %v370 = vld [vmem:[%s280 + $0x2c0] sm:$0xff]
                %371 = vst [vmem:[%s281 + $0x160] sm:$0xff] %v370
                %v372 = vld [vmem:[%s280 + $0x2c8] sm:$0xff]
                %373 = vst [vmem:[%s281 + $0x168] sm:$0xff] %v372
                %v374 = vld [vmem:[%s280 + $0x2d0] sm:$0xff]
                %375 = vst [vmem:[%s281 + $0x170] sm:$0xff] %v374
                %v376 = vld [vmem:[%s280 + $0x2d8] sm:$0xff]
                %377 = vst [vmem:[%s281 + $0x178] sm:$0xff] %v376
                %v378 = vld [vmem:[%s280 + $0x300] sm:$0xff]
                %379 = vst [vmem:[%s281 + $0x180] sm:$0xff] %v378
                %v380 = vld [vmem:[%s280 + $0x308] sm:$0xff]
                %381 = vst [vmem:[%s281 + $0x188] sm:$0xff] %v380
                %v382 = vld [vmem:[%s280 + $0x310] sm:$0xff]
                %383 = vst [vmem:[%s281 + $0x190] sm:$0xff] %v382
                %v384 = vld [vmem:[%s280 + $0x318] sm:$0xff]
                %385 = vst [vmem:[%s281 + $0x198] sm:$0xff] %v384
                %v386 = vld [vmem:[%s280 + $0x340] sm:$0xff]
                %387 = vst [vmem:[%s281 + $0x1a0] sm:$0xff] %v386
                %v388 = vld [vmem:[%s280 + $0x348] sm:$0xff]
                %389 = vst [vmem:[%s281 + $0x1a8] sm:$0xff] %v388
                %v390 = vld [vmem:[%s280 + $0x350] sm:$0xff]
                %391 = vst [vmem:[%s281 + $0x1b0] sm:$0xff] %v390
                %v392 = vld [vmem:[%s280 + $0x358] sm:$0xff]
                %393 = vst [vmem:[%s281 + $0x1b8] sm:$0xff] %v392
                %v394 = vld [vmem:[%s280 + $0x380] sm:$0xff]
                %395 = vst [vmem:[%s281 + $0x1c0] sm:$0xff] %v394
                %v396 = vld [vmem:[%s280 + $0x388] sm:$0xff]
                %397 = vst [vmem:[%s281 + $0x1c8] sm:$0xff] %v396
                %v398 = vld [vmem:[%s280 + $0x390] sm:$0xff]
                %399 = vst [vmem:[%s281 + $0x1d0] sm:$0xff] %v398
                %v400 = vld [vmem:[%s280 + $0x398] sm:$0xff]
                %401 = vst [vmem:[%s281 + $0x1d8] sm:$0xff] %v400
                %v402 = vld [vmem:[%s280 + $0x3c0] sm:$0xff]
                %403 = vst [vmem:[%s281 + $0x1e0] sm:$0xff] %v402
                %v404 = vld [vmem:[%s280 + $0x3c8] sm:$0xff]
                %405 = vst [vmem:[%s281 + $0x1e8] sm:$0xff] %v404
                %v406 = vld [vmem:[%s280 + $0x3d0] sm:$0xff]
                %407 = vst [vmem:[%s281 + $0x1f0] sm:$0xff] %v406
                %v408 = vld [vmem:[%s280 + $0x3d8] sm:$0xff]
                %409 = vst [vmem:[%s281 + $0x1f8] sm:$0xff] %v408
              $region53: #{face_model_forward.1} parent=47 // loop_footer
                %s279 = sadd.s32 1, %s275
              $region54: #{face_model_forward.1} parent=47 // loop_footer_branch
                %274 = sbr.rel target = $region50
              $region55: #{face_model_forward.1} parent=47 // loop_exit
                _
            $region48: #{face_model_forward.1} parent=43 // pred_fallthru
              _
            // Predicated region
            $region56: #{face_model_forward.1} parent=43 // pred_check
              _
            $region57: #{face_model_forward.1} parent=43 // pred_check_branch
              %411 = sbr.rel target = $region59
            $region58: #{face_model_forward.1} parent=43 // pred_region
              _
            $region59: #{face_model_forward.1} parent=43 // pred_fallthru
              _
          $region44: #{face_model_forward.1} parent=39 // pred_fallthru
            _
          %412 = vnop
        $region40: #{face_model_forward.1} parent=35 // pred_fallthru
          _
        // Predicated region
        $region60: #{face_model_forward.1} parent=35 // pred_check
          %p413 = pneg %p168
        $region61: #{face_model_forward.1} parent=35 // pred_check_branch
          %415 = sbr.rel (%p413) target = $region63
        $region62: #{face_model_forward.1} parent=35 // pred_region
          %s416 = smul.u32 4, %s17
          %p417 = scmp.lt.s32.totalorder %s416, 7
          %s418 = scalar_select %p417, %s416, 7
          %s419 = scalar_lea.vmem %s6, %s418
          %s420 = smul.u32 4, %s17
        $region63: #{face_model_forward.1} parent=35 // pred_fallthru
          _
        // Predicated region
        $region64: #{face_model_forward.1} parent=35 // pred_check
          %p421 = pneg %p194
        $region65: #{face_model_forward.1} parent=35 // pred_check_branch
          %423 = sbr.rel (%p421) target = $region67
        $region66: #{face_model_forward.1} parent=35 // pred_region
          %s424 = smul.u32 4, %s17
          %p425 = scmp.lt.s32.totalorder %s424, 7
          %s426 = scalar_select %p425, %s424, 7
          %s427 = scalar_lea.vmem %s7, %s426
          %s428 = smul.u32 4, %s17
        $region67: #{face_model_forward.1} parent=35 // pred_fallthru
          _
      $region36: #{face_model_forward.1} parent=5 // pred_fallthru
        _
      %p429 = scmp.le.s32.totalorder 1, %s17
      %p430 = scmp.lt.s32.totalorder %s17, 3
      %p431 = pnand %p429, %p430
      %p432 = pneg %p431
      // Predicated region
      $region68: #{face_model_forward.1} parent=5 // pred_check
        _
      $region69: #{face_model_forward.1} parent=5 // pred_check_branch
        %434 = sbr.rel (%p431) target = $region71
      $region70: #{face_model_forward.1} parent=5 // pred_region
        %s435 = ssub.s32 %s17, 1
        %s436 = sand.u32 %s135, 1
        %s437 = sand.u32 %s135, 1
        %s438 = smul.addr %s437, 512
        %s439 = scalar_lea.vmem [#allocation2], %s438
        // Predicated region
        $region72: #{face_model_forward.1} parent=70 // pred_check
          %p440 = pneg %p148
        $region73: #{face_model_forward.1} parent=70 // pred_check_branch
          %442 = sbr.rel (%p440) target = $region75
        $region74: #{face_model_forward.1} parent=70 // pred_region
          _
        $region75: #{face_model_forward.1} parent=70 // pred_fallthru
          _
        %p443 = pneg %p38
        %p444 = pneg %p35
        %p445 = pneg %p59
        %p446 = pneg %p56
        %p447 = pneg %p80
        %p448 = pneg %p77
        %p449 = pneg %p101
        %p450 = pneg %p98
        %p451 = pneg %p122
        %p452 = pneg %p119
        %s453 = sand.u32 %s135, 1
        %s454 = sand.u32 %s135, 1
        %s455 = smul.addr %s454, 512
        %s456 = scalar_lea.vmem [#allocation2], %s455
        %p457 = pneg %p148
        %p458 = pneg %p145
        %s459 = smul.u32 4, %s22
        %p460 = scmp.lt.s32.totalorder %s459, 7
        %s461 = scalar_select %p460, %s459, 7
        %s462 = scalar_lea.vmem %s6, %s461
        %p463 = pneg %p174
        %p464 = pneg %p171
        %s465 = smul.u32 4, %s22
        %p466 = scmp.lt.s32.totalorder %s465, 7
        %s467 = scalar_select %p466, %s465, 7
        %s468 = scalar_lea.vmem %s7, %s467
        %p469 = pneg %p200
        %p470 = pneg %p197
        %p471 = pneg %p226
        %p472 = pneg %p223
        %s473 = sand.u32 %s213, 1
        %s474 = scalar_lea.sflag [#allocation4], %s473
        %s475 = sand.u32 %s213, 1
        %s476 = smul.addr %s475, 8
        %s477 = scalar_lea.vmem [#allocation3], %s476
        %s478 = smul.u32 4, %s22
        %s479 = smul.u32 4, %s22
        %p480 = scmp.lt.s32.totalorder %s479, 7
        %s481 = scalar_select %p480, %s479, 7
        %s482 = scalar_lea.vmem %s6, %s481
        %s483 = smul.u32 4, %s22
        %s484 = smul.u32 4, %s22
        %p485 = scmp.lt.s32.totalorder %s484, 7
        %s486 = scalar_select %p485, %s484, 7
        %s487 = scalar_lea.vmem %s7, %s486
        %s488 = smul.u32 4, %s22
        %s489 = smul.u32 4, %s22
        %v491 = vld [vmem:[%s0] sm:$0xf]
        %v492 = vld [vmem:[%s0 + $0x4] sm:$0xf]
        %v493 = vld [vmem:[%s0 + $0x8] sm:$0xf]
        %v494 = vld [vmem:[%s0 + $0xc] sm:$0xf]
        %v495 = vld [vmem:[%s0 + $0x10] sm:$0xf]
        %v496 = vld [vmem:[%s0 + $0x14] sm:$0xf]
        %v497 = vld [vmem:[%s0 + $0x18] sm:$0xf]
        %v498 = vld [vmem:[%s0 + $0x1c] sm:$0xf]
        %v499 = vld [vmem:[%s0 + $0x20] sm:$0xf]
        %v500 = vld [vmem:[%s0 + $0x24] sm:$0xf]
        %v501 = vld [vmem:[%s0 + $0x28] sm:$0xf]
        %v502 = vld [vmem:[%s0 + $0x2c] sm:$0xf]
        %v503 = vld [vmem:[%s0 + $0x30] sm:$0xf]
        %v504 = vld [vmem:[%s0 + $0x34] sm:$0xf]
        %v505 = vld [vmem:[%s0 + $0x38] sm:$0xf]
        %v506 = vld [vmem:[%s0 + $0x3c] sm:$0xf]
        %v507 = vld [vmem:[%s0 + $0x40] sm:$0xf]
        %v508 = vld [vmem:[%s0 + $0x44] sm:$0xf]
        %v509 = vld [vmem:[%s0 + $0x48] sm:$0xf]
        %v510 = vld [vmem:[%s0 + $0x4c] sm:$0xf]
        %v511 = vld [vmem:[%s0 + $0x50] sm:$0xf]
        %v512 = vld [vmem:[%s0 + $0x54] sm:$0xf]
        %v513 = vld [vmem:[%s0 + $0x58] sm:$0xf]
        %v514 = vld [vmem:[%s0 + $0x5c] sm:$0xf]
        %v515 = vld [vmem:[%s0 + $0x60] sm:$0xf]
        %v516 = vld [vmem:[%s0 + $0x64] sm:$0xf]
        %v517 = vld [vmem:[%s0 + $0x68] sm:$0xf]
        %v518 = vld [vmem:[%s0 + $0x6c] sm:$0xf]
        %v519 = vld [vmem:[%s0 + $0x70] sm:$0xf]
        %v520 = vld [vmem:[%s0 + $0x74] sm:$0xf]
        %v521 = vld [vmem:[%s0 + $0x78] sm:$0xf]
        %v522 = vld [vmem:[%s0 + $0x7c] sm:$0xf]
        %v523 = vld [vmem:[%s0 + $0x80] sm:$0xf]
        %v524 = vld [vmem:[%s0 + $0x84] sm:$0xf]
        %v525 = vld [vmem:[%s0 + $0x88] sm:$0xf]
        %v526 = vld [vmem:[%s0 + $0x8c] sm:$0xf]
        %v527 = vld [vmem:[%s0 + $0x90] sm:$0xf]
        %v528 = vld [vmem:[%s0 + $0x94] sm:$0xf]
        %v529 = vld [vmem:[%s0 + $0x98] sm:$0xf]
        %v530 = vld [vmem:[%s0 + $0x9c] sm:$0xf]
        %v531 = vld [vmem:[%s0 + $0xa0] sm:$0xf]
        %v532 = vld [vmem:[%s0 + $0xa4] sm:$0xf]
        %v533 = vld [vmem:[%s0 + $0xa8] sm:$0xf]
        %v534 = vld [vmem:[%s0 + $0xac] sm:$0xf]
        %v535 = vld [vmem:[%s0 + $0xb0] sm:$0xf]
        %v536 = vld [vmem:[%s0 + $0xb4] sm:$0xf]
        %v537 = vld [vmem:[%s0 + $0xb8] sm:$0xf]
        %v538 = vld [vmem:[%s0 + $0xbc] sm:$0xf]
        %v539 = vld [vmem:[%s0 + $0xc0] sm:$0xf]
        %v540 = vld [vmem:[%s0 + $0xc4] sm:$0xf]
        %v541 = vld [vmem:[%s0 + $0xc8] sm:$0xf]
        %v542 = vld [vmem:[%s0 + $0xcc] sm:$0xf]
        %v543 = vld [vmem:[%s0 + $0xd0] sm:$0xf]
        %v544 = vld [vmem:[%s0 + $0xd4] sm:$0xf]
        %v545 = vld [vmem:[%s0 + $0xd8] sm:$0xf]
        %v546 = vld [vmem:[%s0 + $0xdc] sm:$0xf]
        %v547 = vld [vmem:[%s0 + $0xe0] sm:$0xf]
        %v548 = vld [vmem:[%s0 + $0xe4] sm:$0xf]
        %v549 = vld [vmem:[%s0 + $0xe8] sm:$0xf]
        %v550 = vld [vmem:[%s0 + $0xec] sm:$0xf]
        %v551 = vld [vmem:[%s0 + $0xf0] sm:$0xf]
        %v552 = vld [vmem:[%s0 + $0xf4] sm:$0xf]
        %v553 = vld [vmem:[%s0 + $0xf8] sm:$0xf]
        %v554 = vld [vmem:[%s0 + $0xfc] sm:$0xf]
        %v555 = vld [vmem:[%s1] sm:$0xf]
        %v556 = vld [vmem:[%s1 + $0x4] sm:$0xf]
        %v557 = vld [vmem:[%s1 + $0x8] sm:$0xf]
        %v558 = vld [vmem:[%s1 + $0xc] sm:$0xf]
        %v559 = vld [vmem:[%s2] sm:$0x1]
        %v561 = vlaneseq
        %v562 = vshrl.u32 %v561, 7
        %v563 = vsub.s32 0, %v562
        %v564 = vrot.slane %v559, %v563
        %v630 = vunpack.c.l.b16 %v491
        %v631 = vunpack.c.l.b16 %v492
        %v632 = vunpack.c.l.b16 %v493
        %v633 = vunpack.c.l.b16 %v494
        %v634 = vunpack.c.l.b16 %v495
        %v635 = vunpack.c.l.b16 %v496
        %v636 = vunpack.c.l.b16 %v497
        %v637 = vunpack.c.l.b16 %v498
        %v638 = vunpack.c.l.b16 %v499
        %v639 = vunpack.c.l.b16 %v500
        %v640 = vunpack.c.l.b16 %v501
        %v641 = vunpack.c.l.b16 %v502
        %v642 = vunpack.c.l.b16 %v503
        %v643 = vunpack.c.l.b16 %v504
        %v644 = vunpack.c.l.b16 %v505
        %v645 = vunpack.c.l.b16 %v506
        %v646 = vunpack.c.l.b16 %v507
        %v647 = vunpack.c.l.b16 %v508
        %v648 = vunpack.c.l.b16 %v509
        %v649 = vunpack.c.l.b16 %v510
        %v650 = vunpack.c.l.b16 %v511
        %v651 = vunpack.c.l.b16 %v512
        %v652 = vunpack.c.l.b16 %v513
        %v653 = vunpack.c.l.b16 %v514
        %v654 = vunpack.c.l.b16 %v515
        %v655 = vunpack.c.l.b16 %v516
        %v656 = vunpack.c.l.b16 %v517
        %v657 = vunpack.c.l.b16 %v518
        %v658 = vunpack.c.l.b16 %v519
        %v659 = vunpack.c.l.b16 %v520
        %v660 = vunpack.c.l.b16 %v521
        %v661 = vunpack.c.l.b16 %v522
        %v662 = vunpack.c.l.b16 %v523
        %v663 = vunpack.c.l.b16 %v524
        %v664 = vunpack.c.l.b16 %v525
        %v665 = vunpack.c.l.b16 %v526
        %v666 = vunpack.c.l.b16 %v527
        %v667 = vunpack.c.l.b16 %v528
        %v668 = vunpack.c.l.b16 %v529
        %v669 = vunpack.c.l.b16 %v530
        %v670 = vunpack.c.l.b16 %v531
        %v671 = vunpack.c.l.b16 %v532
        %v672 = vunpack.c.l.b16 %v533
        %v673 = vunpack.c.l.b16 %v534
        %v674 = vunpack.c.l.b16 %v535
        %v675 = vunpack.c.l.b16 %v536
        %v676 = vunpack.c.l.b16 %v537
        %v677 = vunpack.c.l.b16 %v538
        %v678 = vunpack.c.l.b16 %v539
        %v679 = vunpack.c.l.b16 %v540
        %v680 = vunpack.c.l.b16 %v541
        %v681 = vunpack.c.l.b16 %v542
        %v682 = vunpack.c.l.b16 %v543
        %v683 = vunpack.c.l.b16 %v544
        %v684 = vunpack.c.l.b16 %v545
        %v685 = vunpack.c.l.b16 %v546
        %v686 = vunpack.c.l.b16 %v547
        %v687 = vunpack.c.l.b16 %v548
        %v688 = vunpack.c.l.b16 %v549
        %v689 = vunpack.c.l.b16 %v550
        %v690 = vunpack.c.l.b16 %v551
        %v691 = vunpack.c.l.b16 %v552
        %v692 = vunpack.c.l.b16 %v553
        %v693 = vunpack.c.l.b16 %v554
        %v694 = vpack.c.b16 %v631, %v630
        %v695 = vpack.c.b16 %v633, %v632
        %v696 = vpack.c.b16 %v635, %v634
        %v697 = vpack.c.b16 %v637, %v636
        %v698 = vpack.c.b16 %v639, %v638
        %v699 = vpack.c.b16 %v641, %v640
        %v700 = vpack.c.b16 %v643, %v642
        %v701 = vpack.c.b16 %v645, %v644
        %v702 = vpack.c.b16 %v647, %v646
        %v703 = vpack.c.b16 %v649, %v648
        %v704 = vpack.c.b16 %v651, %v650
        %v705 = vpack.c.b16 %v653, %v652
        %v706 = vpack.c.b16 %v655, %v654
        %v707 = vpack.c.b16 %v657, %v656
        %v708 = vpack.c.b16 %v659, %v658
        %v709 = vpack.c.b16 %v661, %v660
        %v710 = vpack.c.b16 %v663, %v662
        %v711 = vpack.c.b16 %v665, %v664
        %v712 = vpack.c.b16 %v667, %v666
        %v713 = vpack.c.b16 %v669, %v668
        %v714 = vpack.c.b16 %v671, %v670
        %v715 = vpack.c.b16 %v673, %v672
        %v716 = vpack.c.b16 %v675, %v674
        %v717 = vpack.c.b16 %v677, %v676
        %v718 = vpack.c.b16 %v679, %v678
        %v719 = vpack.c.b16 %v681, %v680
        %v720 = vpack.c.b16 %v683, %v682
        %v721 = vpack.c.b16 %v685, %v684
        %v722 = vpack.c.b16 %v687, %v686
        %v723 = vpack.c.b16 %v689, %v688
        %v724 = vpack.c.b16 %v691, %v690
        %v725 = vpack.c.b16 %v693, %v692
        %v730 = vunpack.c.l.b16 %v555
        %v731 = vunpack.c.l.b16 %v556
        %v732 = vunpack.c.l.b16 %v557
        %v733 = vunpack.c.l.b16 %v558
        %v734 = vpack.c.b16 %v731, %v730
        %v735 = vpack.c.b16 %v733, %v732
        %vm738 = vcmask 261120
        %v740 = vsel %vm738, %v694, 0
        %v743 = vsel %vm738, %v695, 0
        %v746 = vsel %vm738, %v696, 0
        %v749 = vsel %vm738, %v697, 0
        %v752 = vsel %vm738, %v698, 0
        %v755 = vsel %vm738, %v699, 0
        %v758 = vsel %vm738, %v700, 0
        %v761 = vsel %vm738, %v701, 0
        %v764 = vsel %vm738, %v702, 0
        %v767 = vsel %vm738, %v703, 0
        %v770 = vsel %vm738, %v704, 0
        %v773 = vsel %vm738, %v705, 0
        %v776 = vsel %vm738, %v706, 0
        %v779 = vsel %vm738, %v707, 0
        %v782 = vsel %vm738, %v708, 0
        %v785 = vsel %vm738, %v709, 0
        %v788 = vsel %vm738, %v710, 0
        %v791 = vsel %vm738, %v711, 0
        %v794 = vsel %vm738, %v712, 0
        %v797 = vsel %vm738, %v713, 0
        %v800 = vsel %vm738, %v714, 0
        %v803 = vsel %vm738, %v715, 0
        %v806 = vsel %vm738, %v716, 0
        %v809 = vsel %vm738, %v717, 0
        %v812 = vsel %vm738, %v718, 0
        %v815 = vsel %vm738, %v719, 0
        %v818 = vsel %vm738, %v720, 0
        %v821 = vsel %vm738, %v721, 0
        %v824 = vsel %vm738, %v722, 0
        %v827 = vsel %vm738, %v723, 0
        %v830 = vsel %vm738, %v724, 0
        %v833 = vsel %vm738, %v725, 0
        %835 = vmatprep.subr.bf16.mxu0 0
        %836 = vmatpush1.bf16.msra.mxu0 0
        %837 = vmatprep.subr.bf16.mxu0 0
        %838 = vmatpush1.bf16.msra.mxu0 0
        %839 = vmatprep.subr.bf16.mxu0 0
        %840 = vmatpush1.bf16.msra.mxu0 0
        %841 = vmatprep.subr.bf16.mxu0 0
        %842 = vmatpush1.bf16.msra.mxu0 0
        %843 = vmatprep.subr.bf16.mxu0 0
        %844 = vmatpush1.bf16.msra.mxu0 0
        %845 = vmatprep.subr.bf16.mxu0 0
        %846 = vmatpush1.bf16.msra.mxu0 0
        %847 = vmatprep.subr.bf16.mxu0 0
        %848 = vmatpush1.bf16.msra.mxu0 %v735
        %849 = vmatprep.subr.bf16.mxu0 0
        %850 = vmatpush1.bf16.msra.mxu0 %v734
        %851 = vmatprep.subr.bf16.mxu0 0
        %852 = vmatpush2.bf16.msra.mxu0 0
        %853 = vmatprep.subr.bf16.mxu0 0
        %854 = vmatpush2.bf16.msra.mxu0 0
        %855 = vmatprep.subr.bf16.mxu0 0
        %856 = vmatpush2.bf16.msra.mxu0 0
        %857 = vmatprep.subr.bf16.mxu0 0
        %858 = vmatpush2.bf16.msra.mxu0 0
        %859 = vmatprep.subr.bf16.mxu0 0
        %860 = vmatpush2.bf16.msra.mxu0 0
        %861 = vmatprep.subr.bf16.mxu0 0
        %862 = vmatpush2.bf16.msra.mxu0 0
        %863 = vmatprep.subr.bf16.mxu0 0
        %864 = vmatpush2.bf16.msra.mxu0 0
        %865 = vmatprep.subr.bf16.mxu0 0
        %866 = vmatpush2.bf16.msra.mxu0 0
        %867 = vmatprep.mubr.bf16.mxu0 0
        %868 = vmatmul.mubr.bf16.gmra.mxu0 %v740
        %v869 = vpop.f32.mrf.mxu0
        %v870 = vadd.f32 %v564, %v869
        %v871 = vpop.f32.mrf.mxu0
        %v872 = vpop.f32.mrf.mxu0
        %v873 = vadd.f32 %v564, %v872
        %v874 = vpop.f32.mrf.mxu0
        %875 = vmatprep.mubr.bf16.mxu0 0
        %876 = vmatmul.mubr.bf16.gmra.mxu0 %v743
        %v877 = vpop.f32.mrf.mxu0
        %v878 = vadd.f32 %v564, %v877
        %v879 = vpop.f32.mrf.mxu0
        %v880 = vpop.f32.mrf.mxu0
        %v881 = vadd.f32 %v564, %v880
        %v882 = vpop.f32.mrf.mxu0
        %883 = vmatprep.mubr.bf16.mxu0 0
        %884 = vmatmul.mubr.bf16.gmra.mxu0 %v746
        %v885 = vpop.f32.mrf.mxu0
        %v886 = vadd.f32 %v564, %v885
        %v887 = vpop.f32.mrf.mxu0
        %v888 = vpop.f32.mrf.mxu0
        %v889 = vadd.f32 %v564, %v888
        %v890 = vpop.f32.mrf.mxu0
        %891 = vmatprep.mubr.bf16.mxu0 0
        %892 = vmatmul.mubr.bf16.gmra.mxu0 %v749
        %v893 = vpop.f32.mrf.mxu0
        %v894 = vadd.f32 %v564, %v893
        %v895 = vpop.f32.mrf.mxu0
        %v896 = vpop.f32.mrf.mxu0
        %v897 = vadd.f32 %v564, %v896
        %v898 = vpop.f32.mrf.mxu0
        %899 = vmatprep.mubr.bf16.mxu0 0
        %900 = vmatmul.mubr.bf16.gmra.mxu0 %v752
        %v901 = vpop.f32.mrf.mxu0
        %v902 = vadd.f32 %v564, %v901
        %v903 = vpop.f32.mrf.mxu0
        %v904 = vpop.f32.mrf.mxu0
        %v905 = vadd.f32 %v564, %v904
        %v906 = vpop.f32.mrf.mxu0
        %907 = vmatprep.mubr.bf16.mxu0 0
        %908 = vmatmul.mubr.bf16.gmra.mxu0 %v755
        %v909 = vpop.f32.mrf.mxu0
        %v910 = vadd.f32 %v564, %v909
        %v911 = vpop.f32.mrf.mxu0
        %v912 = vpop.f32.mrf.mxu0
        %v913 = vadd.f32 %v564, %v912
        %v914 = vpop.f32.mrf.mxu0
        %915 = vmatprep.mubr.bf16.mxu0 0
        %916 = vmatmul.mubr.bf16.gmra.mxu0 %v758
        %v917 = vpop.f32.mrf.mxu0
        %v918 = vadd.f32 %v564, %v917
        %v919 = vpop.f32.mrf.mxu0
        %v920 = vpop.f32.mrf.mxu0
        %v921 = vadd.f32 %v564, %v920
        %v922 = vpop.f32.mrf.mxu0
        %923 = vmatprep.mubr.bf16.mxu0 0
        %924 = vmatmul.mubr.bf16.gmra.mxu0 %v761
        %v925 = vpop.f32.mrf.mxu0
        %v926 = vadd.f32 %v564, %v925
        %v927 = vpop.f32.mrf.mxu0
        %v928 = vpop.f32.mrf.mxu0
        %v929 = vadd.f32 %v564, %v928
        %v930 = vpop.f32.mrf.mxu0
        %931 = vmatprep.mubr.bf16.mxu0 0
        %932 = vmatmul.mubr.bf16.gmra.mxu0 %v764
        %v933 = vpop.f32.mrf.mxu0
        %v934 = vadd.f32 %v564, %v933
        %v935 = vpop.f32.mrf.mxu0
        %v936 = vpop.f32.mrf.mxu0
        %v937 = vadd.f32 %v564, %v936
        %v938 = vpop.f32.mrf.mxu0
        %939 = vmatprep.mubr.bf16.mxu0 0
        %940 = vmatmul.mubr.bf16.gmra.mxu0 %v767
        %v941 = vpop.f32.mrf.mxu0
        %v942 = vadd.f32 %v564, %v941
        %v943 = vpop.f32.mrf.mxu0
        %v944 = vpop.f32.mrf.mxu0
        %v945 = vadd.f32 %v564, %v944
        %v946 = vpop.f32.mrf.mxu0
        %947 = vmatprep.mubr.bf16.mxu0 0
        %948 = vmatmul.mubr.bf16.gmra.mxu0 %v770
        %v949 = vpop.f32.mrf.mxu0
        %v950 = vadd.f32 %v564, %v949
        %v951 = vpop.f32.mrf.mxu0
        %v952 = vpop.f32.mrf.mxu0
        %v953 = vadd.f32 %v564, %v952
        %v954 = vpop.f32.mrf.mxu0
        %955 = vmatprep.mubr.bf16.mxu0 0
        %956 = vmatmul.mubr.bf16.gmra.mxu0 %v773
        %v957 = vpop.f32.mrf.mxu0
        %v958 = vadd.f32 %v564, %v957
        %v959 = vpop.f32.mrf.mxu0
        %v960 = vpop.f32.mrf.mxu0
        %v961 = vadd.f32 %v564, %v960
        %v962 = vpop.f32.mrf.mxu0
        %963 = vmatprep.mubr.bf16.mxu0 0
        %964 = vmatmul.mubr.bf16.gmra.mxu0 %v776
        %v965 = vpop.f32.mrf.mxu0
        %v966 = vadd.f32 %v564, %v965
        %v967 = vpop.f32.mrf.mxu0
        %v968 = vpop.f32.mrf.mxu0
        %v969 = vadd.f32 %v564, %v968
        %v970 = vpop.f32.mrf.mxu0
        %971 = vmatprep.mubr.bf16.mxu0 0
        %972 = vmatmul.mubr.bf16.gmra.mxu0 %v779
        %v973 = vpop.f32.mrf.mxu0
        %v974 = vadd.f32 %v564, %v973
        %v975 = vpop.f32.mrf.mxu0
        %v976 = vpop.f32.mrf.mxu0
        %v977 = vadd.f32 %v564, %v976
        %v978 = vpop.f32.mrf.mxu0
        %979 = vmatprep.mubr.bf16.mxu0 0
        %980 = vmatmul.mubr.bf16.gmra.mxu0 %v782
        %v981 = vpop.f32.mrf.mxu0
        %v982 = vadd.f32 %v564, %v981
        %v983 = vpop.f32.mrf.mxu0
        %v984 = vpop.f32.mrf.mxu0
        %v985 = vadd.f32 %v564, %v984
        %v986 = vpop.f32.mrf.mxu0
        %987 = vmatprep.mubr.bf16.mxu0 0
        %988 = vmatmul.mubr.bf16.gmra.mxu0 %v785
        %v989 = vpop.f32.mrf.mxu0
        %v990 = vadd.f32 %v564, %v989
        %v991 = vpop.f32.mrf.mxu0
        %v992 = vpop.f32.mrf.mxu0
        %v993 = vadd.f32 %v564, %v992
        %v994 = vpop.f32.mrf.mxu0
        %995 = vmatprep.mubr.bf16.mxu0 0
        %996 = vmatmul.mubr.bf16.gmra.mxu0 %v788
        %v997 = vpop.f32.mrf.mxu0
        %v998 = vadd.f32 %v564, %v997
        %v999 = vpop.f32.mrf.mxu0
        %v1000 = vpop.f32.mrf.mxu0
        %v1001 = vadd.f32 %v564, %v1000
        %v1002 = vpop.f32.mrf.mxu0
        %1003 = vmatprep.mubr.bf16.mxu0 0
        %1004 = vmatmul.mubr.bf16.gmra.mxu0 %v791
        %v1005 = vpop.f32.mrf.mxu0
        %v1006 = vadd.f32 %v564, %v1005
        %v1007 = vpop.f32.mrf.mxu0
        %v1008 = vpop.f32.mrf.mxu0
        %v1009 = vadd.f32 %v564, %v1008
        %v1010 = vpop.f32.mrf.mxu0
        %1011 = vmatprep.mubr.bf16.mxu0 0
        %1012 = vmatmul.mubr.bf16.gmra.mxu0 %v794
        %v1013 = vpop.f32.mrf.mxu0
        %v1014 = vadd.f32 %v564, %v1013
        %v1015 = vpop.f32.mrf.mxu0
        %v1016 = vpop.f32.mrf.mxu0
        %v1017 = vadd.f32 %v564, %v1016
        %v1018 = vpop.f32.mrf.mxu0
        %1019 = vmatprep.mubr.bf16.mxu0 0
        %1020 = vmatmul.mubr.bf16.gmra.mxu0 %v797
        %v1021 = vpop.f32.mrf.mxu0
        %v1022 = vadd.f32 %v564, %v1021
        %v1023 = vpop.f32.mrf.mxu0
        %v1024 = vpop.f32.mrf.mxu0
        %v1025 = vadd.f32 %v564, %v1024
        %v1026 = vpop.f32.mrf.mxu0
        %1027 = vmatprep.mubr.bf16.mxu0 0
        %1028 = vmatmul.mubr.bf16.gmra.mxu0 %v800
        %v1029 = vpop.f32.mrf.mxu0
        %v1030 = vadd.f32 %v564, %v1029
        %v1031 = vpop.f32.mrf.mxu0
        %v1032 = vpop.f32.mrf.mxu0
        %v1033 = vadd.f32 %v564, %v1032
        %v1034 = vpop.f32.mrf.mxu0
        %1035 = vmatprep.mubr.bf16.mxu0 0
        %1036 = vmatmul.mubr.bf16.gmra.mxu0 %v803
        %v1037 = vpop.f32.mrf.mxu0
        %v1038 = vadd.f32 %v564, %v1037
        %v1039 = vpop.f32.mrf.mxu0
        %v1040 = vpop.f32.mrf.mxu0
        %v1041 = vadd.f32 %v564, %v1040
        %v1042 = vpop.f32.mrf.mxu0
        %1043 = vmatprep.mubr.bf16.mxu0 0
        %1044 = vmatmul.mubr.bf16.gmra.mxu0 %v806
        %v1045 = vpop.f32.mrf.mxu0
        %v1046 = vadd.f32 %v564, %v1045
        %v1047 = vpop.f32.mrf.mxu0
        %v1048 = vpop.f32.mrf.mxu0
        %v1049 = vadd.f32 %v564, %v1048
        %v1050 = vpop.f32.mrf.mxu0
        %1051 = vmatprep.mubr.bf16.mxu0 0
        %1052 = vmatmul.mubr.bf16.gmra.mxu0 %v809
        %v1053 = vpop.f32.mrf.mxu0
        %v1054 = vadd.f32 %v564, %v1053
        %v1055 = vpop.f32.mrf.mxu0
        %v1056 = vpop.f32.mrf.mxu0
        %v1057 = vadd.f32 %v564, %v1056
        %v1058 = vpop.f32.mrf.mxu0
        %1059 = vmatprep.mubr.bf16.mxu0 0
        %1060 = vmatmul.mubr.bf16.gmra.mxu0 %v812
        %v1061 = vpop.f32.mrf.mxu0
        %v1062 = vadd.f32 %v564, %v1061
        %v1063 = vpop.f32.mrf.mxu0
        %v1064 = vpop.f32.mrf.mxu0
        %v1065 = vadd.f32 %v564, %v1064
        %v1066 = vpop.f32.mrf.mxu0
        %1067 = vmatprep.mubr.bf16.mxu0 0
        %1068 = vmatmul.mubr.bf16.gmra.mxu0 %v815
        %v1069 = vpop.f32.mrf.mxu0
        %v1070 = vadd.f32 %v564, %v1069
        %v1071 = vpop.f32.mrf.mxu0
        %v1072 = vpop.f32.mrf.mxu0
        %v1073 = vadd.f32 %v564, %v1072
        %v1074 = vpop.f32.mrf.mxu0
        %1075 = vmatprep.mubr.bf16.mxu0 0
        %1076 = vmatmul.mubr.bf16.gmra.mxu0 %v818
        %v1077 = vpop.f32.mrf.mxu0
        %v1078 = vadd.f32 %v564, %v1077
        %v1079 = vpop.f32.mrf.mxu0
        %v1080 = vpop.f32.mrf.mxu0
        %v1081 = vadd.f32 %v564, %v1080
        %v1082 = vpop.f32.mrf.mxu0
        %1083 = vmatprep.mubr.bf16.mxu0 0
        %1084 = vmatmul.mubr.bf16.gmra.mxu0 %v821
        %v1085 = vpop.f32.mrf.mxu0
        %v1086 = vadd.f32 %v564, %v1085
        %v1087 = vpop.f32.mrf.mxu0
        %v1088 = vpop.f32.mrf.mxu0
        %v1089 = vadd.f32 %v564, %v1088
        %v1090 = vpop.f32.mrf.mxu0
        %1091 = vmatprep.mubr.bf16.mxu0 0
        %1092 = vmatmul.mubr.bf16.gmra.mxu0 %v824
        %v1093 = vpop.f32.mrf.mxu0
        %v1094 = vadd.f32 %v564, %v1093
        %v1095 = vpop.f32.mrf.mxu0
        %v1096 = vpop.f32.mrf.mxu0
        %v1097 = vadd.f32 %v564, %v1096
        %v1098 = vpop.f32.mrf.mxu0
        %1099 = vmatprep.mubr.bf16.mxu0 0
        %1100 = vmatmul.mubr.bf16.gmra.mxu0 %v827
        %v1101 = vpop.f32.mrf.mxu0
        %v1102 = vadd.f32 %v564, %v1101
        %v1103 = vpop.f32.mrf.mxu0
        %v1104 = vpop.f32.mrf.mxu0
        %v1105 = vadd.f32 %v564, %v1104
        %v1106 = vpop.f32.mrf.mxu0
        %1107 = vmatprep.mubr.bf16.mxu0 0
        %1108 = vmatmul.mubr.bf16.gmra.mxu0 %v830
        %v1109 = vpop.f32.mrf.mxu0
        %v1110 = vadd.f32 %v564, %v1109
        %v1111 = vpop.f32.mrf.mxu0
        %v1112 = vpop.f32.mrf.mxu0
        %v1113 = vadd.f32 %v564, %v1112
        %v1114 = vpop.f32.mrf.mxu0
        %1115 = vmatprep.mubr.bf16.mxu0 0
        %1116 = vmatmul.mubr.bf16.gmra.mxu0 %v833
        %v1117 = vpop.f32.mrf.mxu0
        %v1118 = vadd.f32 %v564, %v1117
        %v1119 = vpop.f32.mrf.mxu0
        %v1120 = vpop.f32.mrf.mxu0
        %v1121 = vadd.f32 %v564, %v1120
        %v1122 = vpop.f32.mrf.mxu0
        %1123 = vdwg.mxu0
        %v1124 = vmax.f32 %v870, 0.0
        %v1125 = vmax.f32 %v873, 0.0
        %v1126 = vmax.f32 %v878, 0.0
        %v1127 = vmax.f32 %v881, 0.0
        %v1128 = vmax.f32 %v886, 0.0
        %v1129 = vmax.f32 %v889, 0.0
        %v1130 = vmax.f32 %v894, 0.0
        %v1131 = vmax.f32 %v897, 0.0
        %v1132 = vmax.f32 %v902, 0.0
        %v1133 = vmax.f32 %v905, 0.0
        %v1134 = vmax.f32 %v910, 0.0
        %v1135 = vmax.f32 %v913, 0.0
        %v1136 = vmax.f32 %v918, 0.0
        %v1137 = vmax.f32 %v921, 0.0
        %v1138 = vmax.f32 %v926, 0.0
        %v1139 = vmax.f32 %v929, 0.0
        %v1140 = vmax.f32 %v934, 0.0
        %v1141 = vmax.f32 %v937, 0.0
        %v1142 = vmax.f32 %v942, 0.0
        %v1143 = vmax.f32 %v945, 0.0
        %v1144 = vmax.f32 %v950, 0.0
        %v1145 = vmax.f32 %v953, 0.0
        %v1146 = vmax.f32 %v958, 0.0
        %v1147 = vmax.f32 %v961, 0.0
        %v1148 = vmax.f32 %v966, 0.0
        %v1149 = vmax.f32 %v969, 0.0
        %v1150 = vmax.f32 %v974, 0.0
        %v1151 = vmax.f32 %v977, 0.0
        %v1152 = vmax.f32 %v982, 0.0
        %v1153 = vmax.f32 %v985, 0.0
        %v1154 = vmax.f32 %v990, 0.0
        %v1155 = vmax.f32 %v993, 0.0
        %v1156 = vmax.f32 %v998, 0.0
        %v1157 = vmax.f32 %v1001, 0.0
        %v1158 = vmax.f32 %v1006, 0.0
        %v1159 = vmax.f32 %v1009, 0.0
        %v1160 = vmax.f32 %v1014, 0.0
        %v1161 = vmax.f32 %v1017, 0.0
        %v1162 = vmax.f32 %v1022, 0.0
        %v1163 = vmax.f32 %v1025, 0.0
        %v1164 = vmax.f32 %v1030, 0.0
        %v1165 = vmax.f32 %v1033, 0.0
        %v1166 = vmax.f32 %v1038, 0.0
        %v1167 = vmax.f32 %v1041, 0.0
        %v1168 = vmax.f32 %v1046, 0.0
        %v1169 = vmax.f32 %v1049, 0.0
        %v1170 = vmax.f32 %v1054, 0.0
        %v1171 = vmax.f32 %v1057, 0.0
        %v1172 = vmax.f32 %v1062, 0.0
        %v1173 = vmax.f32 %v1065, 0.0
        %v1174 = vmax.f32 %v1070, 0.0
        %v1175 = vmax.f32 %v1073, 0.0
        %v1176 = vmax.f32 %v1078, 0.0
        %v1177 = vmax.f32 %v1081, 0.0
        %v1178 = vmax.f32 %v1086, 0.0
        %v1179 = vmax.f32 %v1089, 0.0
        %v1180 = vmax.f32 %v1094, 0.0
        %v1181 = vmax.f32 %v1097, 0.0
        %v1182 = vmax.f32 %v1102, 0.0
        %v1183 = vmax.f32 %v1105, 0.0
        %v1184 = vmax.f32 %v1110, 0.0
        %v1185 = vmax.f32 %v1113, 0.0
        %v1186 = vmax.f32 %v1118, 0.0
        %v1187 = vmax.f32 %v1121, 0.0
        %v1188 = vadd.f32 %v1124, %v1125
        %v1189 = vadd.f32 %v1188, %v1126
        %v1190 = vadd.f32 %v1189, %v1127
        %v1191 = vadd.f32 %v1190, %v1128
        %v1192 = vadd.f32 %v1191, %v1129
        %v1193 = vadd.f32 %v1192, %v1130
        %v1194 = vadd.f32 %v1193, %v1131
        %v1195 = vadd.f32 %v1194, %v1132
        %v1196 = vadd.f32 %v1195, %v1133
        %v1197 = vadd.f32 %v1196, %v1134
        %v1198 = vadd.f32 %v1197, %v1135
        %v1199 = vadd.f32 %v1198, %v1136
        %v1200 = vadd.f32 %v1199, %v1137
        %v1201 = vadd.f32 %v1200, %v1138
        %v1202 = vadd.f32 %v1201, %v1139
        %v1203 = vadd.f32 %v1202, %v1140
        %v1204 = vadd.f32 %v1203, %v1141
        %v1205 = vadd.f32 %v1204, %v1142
        %v1206 = vadd.f32 %v1205, %v1143
        %v1207 = vadd.f32 %v1206, %v1144
        %v1208 = vadd.f32 %v1207, %v1145
        %v1209 = vadd.f32 %v1208, %v1146
        %v1210 = vadd.f32 %v1209, %v1147
        %v1211 = vadd.f32 %v1210, %v1148
        %v1212 = vadd.f32 %v1211, %v1149
        %v1213 = vadd.f32 %v1212, %v1150
        %v1214 = vadd.f32 %v1213, %v1151
        %v1215 = vadd.f32 %v1214, %v1152
        %v1216 = vadd.f32 %v1215, %v1153
        %v1217 = vadd.f32 %v1216, %v1154
        %v1218 = vadd.f32 %v1217, %v1155
        %v1219 = vrot.slane %v1218, 4
        %v1220 = vadd.f32 %v1218, %v1219
        %v1221 = vrot.slane %v1220, 2
        %v1222 = vadd.f32 %v1220, %v1221
        %v1223 = vrot.slane %v1222, 1
        %v1224 = vadd.f32 %v1222, %v1223
        %v1225 = vadd.f32 %v1156, %v1157
        %v1226 = vadd.f32 %v1225, %v1158
        %v1227 = vadd.f32 %v1226, %v1159
        %v1228 = vadd.f32 %v1227, %v1160
        %v1229 = vadd.f32 %v1228, %v1161
        %v1230 = vadd.f32 %v1229, %v1162
        %v1231 = vadd.f32 %v1230, %v1163
        %v1232 = vadd.f32 %v1231, %v1164
        %v1233 = vadd.f32 %v1232, %v1165
        %v1234 = vadd.f32 %v1233, %v1166
        %v1235 = vadd.f32 %v1234, %v1167
        %v1236 = vadd.f32 %v1235, %v1168
        %v1237 = vadd.f32 %v1236, %v1169
        %v1238 = vadd.f32 %v1237, %v1170
        %v1239 = vadd.f32 %v1238, %v1171
        %v1240 = vadd.f32 %v1239, %v1172
        %v1241 = vadd.f32 %v1240, %v1173
        %v1242 = vadd.f32 %v1241, %v1174
        %v1243 = vadd.f32 %v1242, %v1175
        %v1244 = vadd.f32 %v1243, %v1176
        %v1245 = vadd.f32 %v1244, %v1177
        %v1246 = vadd.f32 %v1245, %v1178
        %v1247 = vadd.f32 %v1246, %v1179
        %v1248 = vadd.f32 %v1247, %v1180
        %v1249 = vadd.f32 %v1248, %v1181
        %v1250 = vadd.f32 %v1249, %v1182
        %v1251 = vadd.f32 %v1250, %v1183
        %v1252 = vadd.f32 %v1251, %v1184
        %v1253 = vadd.f32 %v1252, %v1185
        %v1254 = vadd.f32 %v1253, %v1186
        %v1255 = vadd.f32 %v1254, %v1187
        %v1256 = vrot.slane %v1255, 4
        %v1257 = vadd.f32 %v1255, %v1256
        %v1258 = vrot.slane %v1257, 2
        %v1259 = vadd.f32 %v1257, %v1258
        %v1260 = vrot.slane %v1259, 1
        %v1261 = vadd.f32 %v1259, %v1260
        %v1262 = vmul.f32 %v1224, 0.00390625
        %v1263 = vmul.f32 %v1261, 0.00390625
        %v1264 = vpack.c.bf16 %v1262, %v1262
        %v1265 = vpack.c.bf16 %v1263, %v1263
        %v1266 = vld [vmem:[%s3] sm:$0xff]
        %v1267 = vld [vmem:[%s3 + $0x8] sm:$0xff]
        %v1268 = vld [vmem:[%s3 + $0x10] sm:$0xff]
        %v1269 = vld [vmem:[%s3 + $0x18] sm:$0xff]
        %v1270 = vld [vmem:[%s3 + $0x20] sm:$0xff]
        %v1271 = vld [vmem:[%s3 + $0x28] sm:$0xff]
        %v1272 = vld [vmem:[%s3 + $0x30] sm:$0xff]
        %v1273 = vld [vmem:[%s3 + $0x38] sm:$0xff]
        %v1274 = vld [vmem:[%s3 + $0x40] sm:$0xff]
        %v1275 = vld [vmem:[%s3 + $0x48] sm:$0xff]
        %v1276 = vld [vmem:[%s3 + $0x50] sm:$0xff]
        %v1277 = vld [vmem:[%s3 + $0x58] sm:$0xff]
        %v1278 = vld [vmem:[%s3 + $0x60] sm:$0xff]
        %v1279 = vld [vmem:[%s3 + $0x68] sm:$0xff]
        %v1280 = vld [vmem:[%s3 + $0x70] sm:$0xff]
        %v1281 = vld [vmem:[%s3 + $0x78] sm:$0xff]
        %v1282 = vld [vmem:[%s3 + $0x80] sm:$0xff]
        %v1283 = vld [vmem:[%s3 + $0x88] sm:$0xff]
        %v1284 = vld [vmem:[%s3 + $0x90] sm:$0xff]
        %v1285 = vld [vmem:[%s3 + $0x98] sm:$0xff]
        %v1286 = vld [vmem:[%s3 + $0xa0] sm:$0xff]
        %v1287 = vld [vmem:[%s3 + $0xa8] sm:$0xff]
        %v1288 = vld [vmem:[%s3 + $0xb0] sm:$0xff]
        %v1289 = vld [vmem:[%s3 + $0xb8] sm:$0xff]
        %v1290 = vld [vmem:[%s3 + $0xc0] sm:$0xff]
        %v1291 = vld [vmem:[%s3 + $0xc8] sm:$0xff]
        %v1292 = vld [vmem:[%s3 + $0xd0] sm:$0xff]
        %v1293 = vld [vmem:[%s3 + $0xd8] sm:$0xff]
        %v1294 = vld [vmem:[%s3 + $0xe0] sm:$0xff]
        %v1295 = vld [vmem:[%s3 + $0xe8] sm:$0xff]
        %v1296 = vld [vmem:[%s3 + $0xf0] sm:$0xff]
        %v1297 = vld [vmem:[%s3 + $0xf8] sm:$0xff]
        %v1298 = vld [vmem:[%s4] sm:$0xf]
        %v1300 = vlaneseq
        %v1301 = vshrl.u32 %v1300, 7
        %v1302 = vsub.s32 0, %v1301
        %v1303 = vrot.slane %v1298, %v1302
        %v1304 = vlaneseq
        %v1305 = vshrl.u32 %v1304, 7
        %v1306 = vsub.s32 1, %v1305
        %v1307 = vrot.slane %v1298, %v1306
        %v1308 = vlaneseq
        %v1309 = vshrl.u32 %v1308, 7
        %v1310 = vsub.s32 2, %v1309
        %v1311 = vrot.slane %v1298, %v1310
        %v1312 = vlaneseq
        %v1313 = vshrl.u32 %v1312, 7
        %v1314 = vsub.s32 3, %v1313
        %v1315 = vrot.slane %v1298, %v1314
        %v1322 = vunpack.c.l.b16 %v1264
        %v1323 = vunpack.c.l.b16 %v1265
        %vm1324 = vcmask 1041409
        %v1325 = vsel %vm1324, %v1323, %v1322
        %v1326 = vpack.c.b16 %v1325, %v1325
        %v1360 = vunpack.c.l.b16 %v1266
        %v1361 = vunpack.c.h.b16 %v1266
        %v1362 = vunpack.c.l.b16 %v1267
        %v1363 = vunpack.c.h.b16 %v1267
        %v1364 = vunpack.c.l.b16 %v1268
        %v1365 = vunpack.c.h.b16 %v1268
        %v1366 = vunpack.c.l.b16 %v1269
        %v1367 = vunpack.c.h.b16 %v1269
        %v1368 = vunpack.c.l.b16 %v1270
        %v1369 = vunpack.c.h.b16 %v1270
        %v1370 = vunpack.c.l.b16 %v1271
        %v1371 = vunpack.c.h.b16 %v1271
        %v1372 = vunpack.c.l.b16 %v1272
        %v1373 = vunpack.c.h.b16 %v1272
        %v1374 = vunpack.c.l.b16 %v1273
        %v1375 = vunpack.c.h.b16 %v1273
        %v1376 = vunpack.c.l.b16 %v1274
        %v1377 = vunpack.c.h.b16 %v1274
        %v1378 = vunpack.c.l.b16 %v1275
        %v1379 = vunpack.c.h.b16 %v1275
        %v1380 = vunpack.c.l.b16 %v1276
        %v1381 = vunpack.c.h.b16 %v1276
        %v1382 = vunpack.c.l.b16 %v1277
        %v1383 = vunpack.c.h.b16 %v1277
        %v1384 = vunpack.c.l.b16 %v1278
        %v1385 = vunpack.c.h.b16 %v1278
        %v1386 = vunpack.c.l.b16 %v1279
        %v1387 = vunpack.c.h.b16 %v1279
        %v1388 = vunpack.c.l.b16 %v1280
        %v1389 = vunpack.c.h.b16 %v1280
        %v1390 = vunpack.c.l.b16 %v1281
        %v1391 = vunpack.c.h.b16 %v1281
        %v1392 = vunpack.c.l.b16 %v1282
        %v1393 = vunpack.c.h.b16 %v1282
        %v1394 = vunpack.c.l.b16 %v1283
        %v1395 = vunpack.c.h.b16 %v1283
        %v1396 = vunpack.c.l.b16 %v1284
        %v1397 = vunpack.c.h.b16 %v1284
        %v1398 = vunpack.c.l.b16 %v1285
        %v1399 = vunpack.c.h.b16 %v1285
        %v1400 = vunpack.c.l.b16 %v1286
        %v1401 = vunpack.c.h.b16 %v1286
        %v1402 = vunpack.c.l.b16 %v1287
        %v1403 = vunpack.c.h.b16 %v1287
        %v1404 = vunpack.c.l.b16 %v1288
        %v1405 = vunpack.c.h.b16 %v1288
        %v1406 = vunpack.c.l.b16 %v1289
        %v1407 = vunpack.c.h.b16 %v1289
        %v1408 = vunpack.c.l.b16 %v1290
        %v1409 = vunpack.c.h.b16 %v1290
        %v1410 = vunpack.c.l.b16 %v1291
        %v1411 = vunpack.c.h.b16 %v1291
        %v1412 = vunpack.c.l.b16 %v1292
        %v1413 = vunpack.c.h.b16 %v1292
        %v1414 = vunpack.c.l.b16 %v1293
        %v1415 = vunpack.c.h.b16 %v1293
        %v1416 = vunpack.c.l.b16 %v1294
        %v1417 = vunpack.c.h.b16 %v1294
        %v1418 = vunpack.c.l.b16 %v1295
        %v1419 = vunpack.c.h.b16 %v1295
        %v1420 = vunpack.c.l.b16 %v1296
        %v1421 = vunpack.c.h.b16 %v1296
        %v1422 = vunpack.c.l.b16 %v1297
        %v1423 = vunpack.c.h.b16 %v1297
        %v1424 = vpack.c.b16 %v1364, %v1360
        %v1425 = vpack.c.b16 %v1365, %v1361
        %v1426 = vpack.c.b16 %v1366, %v1362
        %v1427 = vpack.c.b16 %v1367, %v1363
        %v1428 = vpack.c.b16 %v1372, %v1368
        %v1429 = vpack.c.b16 %v1373, %v1369
        %v1430 = vpack.c.b16 %v1374, %v1370
        %v1431 = vpack.c.b16 %v1375, %v1371
        %v1432 = vpack.c.b16 %v1380, %v1376
        %v1433 = vpack.c.b16 %v1381, %v1377
        %v1434 = vpack.c.b16 %v1382, %v1378
        %v1435 = vpack.c.b16 %v1383, %v1379
        %v1436 = vpack.c.b16 %v1388, %v1384
        %v1437 = vpack.c.b16 %v1389, %v1385
        %v1438 = vpack.c.b16 %v1390, %v1386
        %v1439 = vpack.c.b16 %v1391, %v1387
        %v1440 = vpack.c.b16 %v1396, %v1392
        %v1441 = vpack.c.b16 %v1397, %v1393
        %v1442 = vpack.c.b16 %v1398, %v1394
        %v1443 = vpack.c.b16 %v1399, %v1395
        %v1444 = vpack.c.b16 %v1404, %v1400
        %v1445 = vpack.c.b16 %v1405, %v1401
        %v1446 = vpack.c.b16 %v1406, %v1402
        %v1447 = vpack.c.b16 %v1407, %v1403
        %v1448 = vpack.c.b16 %v1412, %v1408
        %v1449 = vpack.c.b16 %v1413, %v1409
        %v1450 = vpack.c.b16 %v1414, %v1410
        %v1451 = vpack.c.b16 %v1415, %v1411
        %v1452 = vpack.c.b16 %v1420, %v1416
        %v1453 = vpack.c.b16 %v1421, %v1417
        %v1454 = vpack.c.b16 %v1422, %v1418
        %v1455 = vpack.c.b16 %v1423, %v1419
        %1488 = vmatprep.subr.bf16.mxu0 %v1453
        %1489 = vmatpush1.bf16.msra.mxu0 %v1452
        %1490 = vmatprep.subr.bf16.mxu0 %v1449
        %1491 = vmatpush1.bf16.msra.mxu0 %v1448
        %1492 = vmatprep.subr.bf16.mxu0 %v1445
        %1493 = vmatpush1.bf16.msra.mxu0 %v1444
        %1494 = vmatprep.subr.bf16.mxu0 %v1441
        %1495 = vmatpush1.bf16.msra.mxu0 %v1440
        %1496 = vmatprep.subr.bf16.mxu0 %v1437
        %1497 = vmatpush1.bf16.msra.mxu0 %v1436
        %1498 = vmatprep.subr.bf16.mxu0 %v1433
        %1499 = vmatpush1.bf16.msra.mxu0 %v1432
        %1500 = vmatprep.subr.bf16.mxu0 %v1429
        %1501 = vmatpush1.bf16.msra.mxu0 %v1428
        %1502 = vmatprep.subr.bf16.mxu0 %v1425
        %1503 = vmatpush1.bf16.msra.mxu0 %v1424
        %1504 = vmatprep.subr.bf16.mxu0 0
        %1505 = vmatpush2.bf16.msra.mxu0 0
        %1506 = vmatprep.subr.bf16.mxu0 0
        %1507 = vmatpush2.bf16.msra.mxu0 0
        %1508 = vmatprep.subr.bf16.mxu0 0
        %1509 = vmatpush2.bf16.msra.mxu0 0
        %1510 = vmatprep.subr.bf16.mxu0 0
        %1511 = vmatpush2.bf16.msra.mxu0 0
        %1512 = vmatprep.subr.bf16.mxu0 0
        %1513 = vmatpush2.bf16.msra.mxu0 0
        %1514 = vmatprep.subr.bf16.mxu0 0
        %1515 = vmatpush2.bf16.msra.mxu0 0
        %1516 = vmatprep.subr.bf16.mxu0 0
        %1517 = vmatpush2.bf16.msra.mxu0 0
        %1518 = vmatprep.subr.bf16.mxu0 0
        %1519 = vmatpush2.bf16.msra.mxu0 0
        %1520 = vmatprep.mubr.bf16.mxu0 0
        %1521 = vmatmul.mubr.bf16.gmra.mxu0 %v1326
        %v1522 = vpop.f32.mrf.mxu0
        %v1523 = vadd.f32 %v1303, %v1522
        %v1524 = vpop.f32.mrf.mxu0
        %v1525 = vadd.f32 %v1307, %v1524
        %v1526 = vpop.f32.mrf.mxu0
        %v1527 = vpop.f32.mrf.mxu0
        %1528 = vdwg.mxu0
        %1529 = vmatprep.subr.bf16.mxu0 %v1455
        %1530 = vmatpush1.bf16.msra.mxu0 %v1454
        %1531 = vmatprep.subr.bf16.mxu0 %v1451
        %1532 = vmatpush1.bf16.msra.mxu0 %v1450
        %1533 = vmatprep.subr.bf16.mxu0 %v1447
        %1534 = vmatpush1.bf16.msra.mxu0 %v1446
        %1535 = vmatprep.subr.bf16.mxu0 %v1443
        %1536 = vmatpush1.bf16.msra.mxu0 %v1442
        %1537 = vmatprep.subr.bf16.mxu0 %v1439
        %1538 = vmatpush1.bf16.msra.mxu0 %v1438
        %1539 = vmatprep.subr.bf16.mxu0 %v1435
        %1540 = vmatpush1.bf16.msra.mxu0 %v1434
        %1541 = vmatprep.subr.bf16.mxu0 %v1431
        %1542 = vmatpush1.bf16.msra.mxu0 %v1430
        %1543 = vmatprep.subr.bf16.mxu0 %v1427
        %1544 = vmatpush1.bf16.msra.mxu0 %v1426
        %1545 = vmatprep.subr.bf16.mxu0 0
        %1546 = vmatpush2.bf16.msra.mxu0 0
        %1547 = vmatprep.subr.bf16.mxu0 0
        %1548 = vmatpush2.bf16.msra.mxu0 0
        %1549 = vmatprep.subr.bf16.mxu0 0
        %1550 = vmatpush2.bf16.msra.mxu0 0
        %1551 = vmatprep.subr.bf16.mxu0 0
        %1552 = vmatpush2.bf16.msra.mxu0 0
        %1553 = vmatprep.subr.bf16.mxu0 0
        %1554 = vmatpush2.bf16.msra.mxu0 0
        %1555 = vmatprep.subr.bf16.mxu0 0
        %1556 = vmatpush2.bf16.msra.mxu0 0
        %1557 = vmatprep.subr.bf16.mxu0 0
        %1558 = vmatpush2.bf16.msra.mxu0 0
        %1559 = vmatprep.subr.bf16.mxu0 0
        %1560 = vmatpush2.bf16.msra.mxu0 0
        %1561 = vmatprep.mubr.bf16.mxu0 0
        %1562 = vmatmul.mubr.bf16.gmra.mxu0 %v1326
        %v1563 = vpop.f32.mrf.mxu0
        %v1564 = vadd.f32 %v1311, %v1563
        %v1565 = vpop.f32.mrf.mxu0
        %v1566 = vadd.f32 %v1315, %v1565
        %v1567 = vpop.f32.mrf.mxu0
        %v1568 = vpop.f32.mrf.mxu0
        %1569 = vdwg.mxu0
        %v1570 = vpack.c.bf16 %v1523, %v1523
        %v1571 = vpack.c.bf16 %v1525, %v1525
        %v1572 = vpack.c.bf16 %v1564, %v1564
        %v1573 = vpack.c.bf16 %v1566, %v1566
        %v1574 = vld [vmem:[%s439] sm:$0xff]
        %v1575 = vld [vmem:[%s439 + $0x8] sm:$0xff]
        %v1576 = vld [vmem:[%s439 + $0x10] sm:$0xff]
        %v1577 = vld [vmem:[%s439 + $0x18] sm:$0xff]
        %v1578 = vld [vmem:[%s439 + $0x20] sm:$0xff]
        %v1579 = vld [vmem:[%s439 + $0x28] sm:$0xff]
        %v1580 = vld [vmem:[%s439 + $0x30] sm:$0xff]
        %v1581 = vld [vmem:[%s439 + $0x38] sm:$0xff]
        %v1582 = vld [vmem:[%s439 + $0x40] sm:$0xff]
        %v1583 = vld [vmem:[%s439 + $0x48] sm:$0xff]
        %v1584 = vld [vmem:[%s439 + $0x50] sm:$0xff]
        %v1585 = vld [vmem:[%s439 + $0x58] sm:$0xff]
        %v1586 = vld [vmem:[%s439 + $0x60] sm:$0xff]
        %v1587 = vld [vmem:[%s439 + $0x68] sm:$0xff]
        %v1588 = vld [vmem:[%s439 + $0x70] sm:$0xff]
        %v1589 = vld [vmem:[%s439 + $0x78] sm:$0xff]
        %v1590 = vld [vmem:[%s439 + $0x80] sm:$0xff]
        %v1591 = vld [vmem:[%s439 + $0x88] sm:$0xff]
        %v1592 = vld [vmem:[%s439 + $0x90] sm:$0xff]
        %v1593 = vld [vmem:[%s439 + $0x98] sm:$0xff]
        %v1594 = vld [vmem:[%s439 + $0xa0] sm:$0xff]
        %v1595 = vld [vmem:[%s439 + $0xa8] sm:$0xff]
        %v1596 = vld [vmem:[%s439 + $0xb0] sm:$0xff]
        %v1597 = vld [vmem:[%s439 + $0xb8] sm:$0xff]
        %v1598 = vld [vmem:[%s439 + $0xc0] sm:$0xff]
        %v1599 = vld [vmem:[%s439 + $0xc8] sm:$0xff]
        %v1600 = vld [vmem:[%s439 + $0xd0] sm:$0xff]
        %v1601 = vld [vmem:[%s439 + $0xd8] sm:$0xff]
        %v1602 = vld [vmem:[%s439 + $0xe0] sm:$0xff]
        %v1603 = vld [vmem:[%s439 + $0xe8] sm:$0xff]
        %v1604 = vld [vmem:[%s439 + $0xf0] sm:$0xff]
        %v1605 = vld [vmem:[%s439 + $0xf8] sm:$0xff]
        %v1606 = vld [vmem:[%s439 + $0x100] sm:$0xff]
        %v1607 = vld [vmem:[%s439 + $0x108] sm:$0xff]
        %v1608 = vld [vmem:[%s439 + $0x110] sm:$0xff]
        %v1609 = vld [vmem:[%s439 + $0x118] sm:$0xff]
        %v1610 = vld [vmem:[%s439 + $0x120] sm:$0xff]
        %v1611 = vld [vmem:[%s439 + $0x128] sm:$0xff]
        %v1612 = vld [vmem:[%s439 + $0x130] sm:$0xff]
        %v1613 = vld [vmem:[%s439 + $0x138] sm:$0xff]
        %v1614 = vld [vmem:[%s439 + $0x140] sm:$0xff]
        %v1615 = vld [vmem:[%s439 + $0x148] sm:$0xff]
        %v1616 = vld [vmem:[%s439 + $0x150] sm:$0xff]
        %v1617 = vld [vmem:[%s439 + $0x158] sm:$0xff]
        %v1618 = vld [vmem:[%s439 + $0x160] sm:$0xff]
        %v1619 = vld [vmem:[%s439 + $0x168] sm:$0xff]
        %v1620 = vld [vmem:[%s439 + $0x170] sm:$0xff]
        %v1621 = vld [vmem:[%s439 + $0x178] sm:$0xff]
        %v1622 = vld [vmem:[%s439 + $0x180] sm:$0xff]
        %v1623 = vld [vmem:[%s439 + $0x188] sm:$0xff]
        %v1624 = vld [vmem:[%s439 + $0x190] sm:$0xff]
        %v1625 = vld [vmem:[%s439 + $0x198] sm:$0xff]
        %v1626 = vld [vmem:[%s439 + $0x1a0] sm:$0xff]
        %v1627 = vld [vmem:[%s439 + $0x1a8] sm:$0xff]
        %v1628 = vld [vmem:[%s439 + $0x1b0] sm:$0xff]
        %v1629 = vld [vmem:[%s439 + $0x1b8] sm:$0xff]
        %v1630 = vld [vmem:[%s439 + $0x1c0] sm:$0xff]
        %v1631 = vld [vmem:[%s439 + $0x1c8] sm:$0xff]
        %v1632 = vld [vmem:[%s439 + $0x1d0] sm:$0xff]
        %v1633 = vld [vmem:[%s439 + $0x1d8] sm:$0xff]
        %v1634 = vld [vmem:[%s439 + $0x1e0] sm:$0xff]
        %v1635 = vld [vmem:[%s439 + $0x1e8] sm:$0xff]
        %v1636 = vld [vmem:[%s439 + $0x1f0] sm:$0xff]
        %v1637 = vld [vmem:[%s439 + $0x1f8] sm:$0xff]
        %v1638 = vunpack.c.l.s8.bf16 %v1574
        %v1639 = vunpack.c.l.s8.bf16 %v1575
        %v1640 = vunpack.c.l.s8.bf16 %v1576
        %v1641 = vunpack.c.l.s8.bf16 %v1577
        %v1642 = vunpack.c.h.s8.bf16 %v1574
        %v1643 = vunpack.c.h.s8.bf16 %v1575
        %v1644 = vunpack.c.h.s8.bf16 %v1576
        %v1645 = vunpack.c.h.s8.bf16 %v1577
        %v1646 = vunpack.c.l.s8.bf16 %v1578
        %v1647 = vunpack.c.l.s8.bf16 %v1579
        %v1648 = vunpack.c.l.s8.bf16 %v1580
        %v1649 = vunpack.c.l.s8.bf16 %v1581
        %v1650 = vunpack.c.h.s8.bf16 %v1578
        %v1651 = vunpack.c.h.s8.bf16 %v1579
        %v1652 = vunpack.c.h.s8.bf16 %v1580
        %v1653 = vunpack.c.h.s8.bf16 %v1581
        %v1654 = vunpack.c.l.s8.bf16 %v1582
        %v1655 = vunpack.c.l.s8.bf16 %v1583
        %v1656 = vunpack.c.l.s8.bf16 %v1584
        %v1657 = vunpack.c.l.s8.bf16 %v1585
        %v1658 = vunpack.c.h.s8.bf16 %v1582
        %v1659 = vunpack.c.h.s8.bf16 %v1583
        %v1660 = vunpack.c.h.s8.bf16 %v1584
        %v1661 = vunpack.c.h.s8.bf16 %v1585
        %v1662 = vunpack.c.l.s8.bf16 %v1586
        %v1663 = vunpack.c.l.s8.bf16 %v1587
        %v1664 = vunpack.c.l.s8.bf16 %v1588
        %v1665 = vunpack.c.l.s8.bf16 %v1589
        %v1666 = vunpack.c.h.s8.bf16 %v1586
        %v1667 = vunpack.c.h.s8.bf16 %v1587
        %v1668 = vunpack.c.h.s8.bf16 %v1588
        %v1669 = vunpack.c.h.s8.bf16 %v1589
        %v1670 = vunpack.c.l.s8.bf16 %v1590
        %v1671 = vunpack.c.l.s8.bf16 %v1591
        %v1672 = vunpack.c.l.s8.bf16 %v1592
        %v1673 = vunpack.c.l.s8.bf16 %v1593
        %v1674 = vunpack.c.h.s8.bf16 %v1590
        %v1675 = vunpack.c.h.s8.bf16 %v1591
        %v1676 = vunpack.c.h.s8.bf16 %v1592
        %v1677 = vunpack.c.h.s8.bf16 %v1593
        %v1678 = vunpack.c.l.s8.bf16 %v1594
        %v1679 = vunpack.c.l.s8.bf16 %v1595
        %v1680 = vunpack.c.l.s8.bf16 %v1596
        %v1681 = vunpack.c.l.s8.bf16 %v1597
        %v1682 = vunpack.c.h.s8.bf16 %v1594
        %v1683 = vunpack.c.h.s8.bf16 %v1595
        %v1684 = vunpack.c.h.s8.bf16 %v1596
        %v1685 = vunpack.c.h.s8.bf16 %v1597
        %v1686 = vunpack.c.l.s8.bf16 %v1598
        %v1687 = vunpack.c.l.s8.bf16 %v1599
        %v1688 = vunpack.c.l.s8.bf16 %v1600
        %v1689 = vunpack.c.l.s8.bf16 %v1601
        %v1690 = vunpack.c.h.s8.bf16 %v1598
        %v1691 = vunpack.c.h.s8.bf16 %v1599
        %v1692 = vunpack.c.h.s8.bf16 %v1600
        %v1693 = vunpack.c.h.s8.bf16 %v1601
        %v1694 = vunpack.c.l.s8.bf16 %v1602
        %v1695 = vunpack.c.l.s8.bf16 %v1603
        %v1696 = vunpack.c.l.s8.bf16 %v1604
        %v1697 = vunpack.c.l.s8.bf16 %v1605
        %v1698 = vunpack.c.h.s8.bf16 %v1602
        %v1699 = vunpack.c.h.s8.bf16 %v1603
        %v1700 = vunpack.c.h.s8.bf16 %v1604
        %v1701 = vunpack.c.h.s8.bf16 %v1605
        %v1702 = vunpack.c.l.s8.bf16 %v1606
        %v1703 = vunpack.c.l.s8.bf16 %v1607
        %v1704 = vunpack.c.l.s8.bf16 %v1608
        %v1705 = vunpack.c.l.s8.bf16 %v1609
        %v1706 = vunpack.c.h.s8.bf16 %v1606
        %v1707 = vunpack.c.h.s8.bf16 %v1607
        %v1708 = vunpack.c.h.s8.bf16 %v1608
        %v1709 = vunpack.c.h.s8.bf16 %v1609
        %v1710 = vunpack.c.l.s8.bf16 %v1610
        %v1711 = vunpack.c.l.s8.bf16 %v1611
        %v1712 = vunpack.c.l.s8.bf16 %v1612
        %v1713 = vunpack.c.l.s8.bf16 %v1613
        %v1714 = vunpack.c.h.s8.bf16 %v1610
        %v1715 = vunpack.c.h.s8.bf16 %v1611
        %v1716 = vunpack.c.h.s8.bf16 %v1612
        %v1717 = vunpack.c.h.s8.bf16 %v1613
        %v1718 = vunpack.c.l.s8.bf16 %v1614
        %v1719 = vunpack.c.l.s8.bf16 %v1615
        %v1720 = vunpack.c.l.s8.bf16 %v1616
        %v1721 = vunpack.c.l.s8.bf16 %v1617
        %v1722 = vunpack.c.h.s8.bf16 %v1614
        %v1723 = vunpack.c.h.s8.bf16 %v1615
        %v1724 = vunpack.c.h.s8.bf16 %v1616
        %v1725 = vunpack.c.h.s8.bf16 %v1617
        %v1726 = vunpack.c.l.s8.bf16 %v1618
        %v1727 = vunpack.c.l.s8.bf16 %v1619
        %v1728 = vunpack.c.l.s8.bf16 %v1620
        %v1729 = vunpack.c.l.s8.bf16 %v1621
        %v1730 = vunpack.c.h.s8.bf16 %v1618
        %v1731 = vunpack.c.h.s8.bf16 %v1619
        %v1732 = vunpack.c.h.s8.bf16 %v1620
        %v1733 = vunpack.c.h.s8.bf16 %v1621
        %v1734 = vunpack.c.l.s8.bf16 %v1622
        %v1735 = vunpack.c.l.s8.bf16 %v1623
        %v1736 = vunpack.c.l.s8.bf16 %v1624
        %v1737 = vunpack.c.l.s8.bf16 %v1625
        %v1738 = vunpack.c.h.s8.bf16 %v1622
        %v1739 = vunpack.c.h.s8.bf16 %v1623
        %v1740 = vunpack.c.h.s8.bf16 %v1624
        %v1741 = vunpack.c.h.s8.bf16 %v1625
        %v1742 = vunpack.c.l.s8.bf16 %v1626
        %v1743 = vunpack.c.l.s8.bf16 %v1627
        %v1744 = vunpack.c.l.s8.bf16 %v1628
        %v1745 = vunpack.c.l.s8.bf16 %v1629
        %v1746 = vunpack.c.h.s8.bf16 %v1626
        %v1747 = vunpack.c.h.s8.bf16 %v1627
        %v1748 = vunpack.c.h.s8.bf16 %v1628
        %v1749 = vunpack.c.h.s8.bf16 %v1629
        %v1750 = vunpack.c.l.s8.bf16 %v1630
        %v1751 = vunpack.c.l.s8.bf16 %v1631
        %v1752 = vunpack.c.l.s8.bf16 %v1632
        %v1753 = vunpack.c.l.s8.bf16 %v1633
        %v1754 = vunpack.c.h.s8.bf16 %v1630
        %v1755 = vunpack.c.h.s8.bf16 %v1631
        %v1756 = vunpack.c.h.s8.bf16 %v1632
        %v1757 = vunpack.c.h.s8.bf16 %v1633
        %v1758 = vunpack.c.l.s8.bf16 %v1634
        %v1759 = vunpack.c.l.s8.bf16 %v1635
        %v1760 = vunpack.c.l.s8.bf16 %v1636
        %v1761 = vunpack.c.l.s8.bf16 %v1637
        %v1762 = vunpack.c.h.s8.bf16 %v1634
        %v1763 = vunpack.c.h.s8.bf16 %v1635
        %v1764 = vunpack.c.h.s8.bf16 %v1636
        %v1765 = vunpack.c.h.s8.bf16 %v1637
        %1766 = vmatprep.subr.bf16.mxu0 %v1667
        %1767 = vmatpush1.bf16.msra.mxu0 %v1666
        %1768 = vmatprep.subr.bf16.mxu0 %v1663
        %1769 = vmatpush1.bf16.msra.mxu0 %v1662
        %1770 = vmatprep.subr.bf16.mxu0 %v1659
        %1771 = vmatpush1.bf16.msra.mxu0 %v1658
        %1772 = vmatprep.subr.bf16.mxu0 %v1655
        %1773 = vmatpush1.bf16.msra.mxu0 %v1654
        %1774 = vmatprep.subr.bf16.mxu0 %v1651
        %1775 = vmatpush1.bf16.msra.mxu0 %v1650
        %1776 = vmatprep.subr.bf16.mxu0 %v1647
        %1777 = vmatpush1.bf16.msra.mxu0 %v1646
        %1778 = vmatprep.subr.bf16.mxu0 %v1643
        %1779 = vmatpush1.bf16.msra.mxu0 %v1642
        %1780 = vmatprep.subr.bf16.mxu0 %v1639
        %1781 = vmatpush1.bf16.msra.mxu0 %v1638
        %1782 = vmatprep.subr.bf16.mxu0 %v1699
        %1783 = vmatpush2.bf16.msra.mxu0 %v1698
        %1784 = vmatprep.subr.bf16.mxu0 %v1695
        %1785 = vmatpush2.bf16.msra.mxu0 %v1694
        %1786 = vmatprep.subr.bf16.mxu0 %v1691
        %1787 = vmatpush2.bf16.msra.mxu0 %v1690
        %1788 = vmatprep.subr.bf16.mxu0 %v1687
        %1789 = vmatpush2.bf16.msra.mxu0 %v1686
        %1790 = vmatprep.subr.bf16.mxu0 %v1683
        %1791 = vmatpush2.bf16.msra.mxu0 %v1682
        %1792 = vmatprep.subr.bf16.mxu0 %v1679
        %1793 = vmatpush2.bf16.msra.mxu0 %v1678
        %1794 = vmatprep.subr.bf16.mxu0 %v1675
        %1795 = vmatpush2.bf16.msra.mxu0 %v1674
        %1796 = vmatprep.subr.bf16.mxu0 %v1671
        %1797 = vmatpush2.bf16.msra.mxu0 %v1670
        %1798 = vmatprep.mubr.bf16.mxu0 %v1571
        %1799 = vmatmul.mubr.bf16.gmra.mxu0 %v1570
        %v1800 = vpop.f32.mrf.mxu0
        %v1801 = vadd.f32 0.0, %v1800
        %v1802 = vpop.f32.mrf.mxu0
        %v1803 = vadd.f32 0.0, %v1802
        %v1804 = vpop.f32.mrf.mxu0
        %v1805 = vpop.f32.mrf.mxu0
        %1806 = vdwg.mxu0
        %1807 = vmatprep.subr.bf16.mxu0 %v1731
        %1808 = vmatpush1.bf16.msra.mxu0 %v1730
        %1809 = vmatprep.subr.bf16.mxu0 %v1727
        %1810 = vmatpush1.bf16.msra.mxu0 %v1726
        %1811 = vmatprep.subr.bf16.mxu0 %v1723
        %1812 = vmatpush1.bf16.msra.mxu0 %v1722
        %1813 = vmatprep.subr.bf16.mxu0 %v1719
        %1814 = vmatpush1.bf16.msra.mxu0 %v1718
        %1815 = vmatprep.subr.bf16.mxu0 %v1715
        %1816 = vmatpush1.bf16.msra.mxu0 %v1714
        %1817 = vmatprep.subr.bf16.mxu0 %v1711
        %1818 = vmatpush1.bf16.msra.mxu0 %v1710
        %1819 = vmatprep.subr.bf16.mxu0 %v1707
        %1820 = vmatpush1.bf16.msra.mxu0 %v1706
        %1821 = vmatprep.subr.bf16.mxu0 %v1703
        %1822 = vmatpush1.bf16.msra.mxu0 %v1702
        %1823 = vmatprep.subr.bf16.mxu0 %v1763
        %1824 = vmatpush2.bf16.msra.mxu0 %v1762
        %1825 = vmatprep.subr.bf16.mxu0 %v1759
        %1826 = vmatpush2.bf16.msra.mxu0 %v1758
        %1827 = vmatprep.subr.bf16.mxu0 %v1755
        %1828 = vmatpush2.bf16.msra.mxu0 %v1754
        %1829 = vmatprep.subr.bf16.mxu0 %v1751
        %1830 = vmatpush2.bf16.msra.mxu0 %v1750
        %1831 = vmatprep.subr.bf16.mxu0 %v1747
        %1832 = vmatpush2.bf16.msra.mxu0 %v1746
        %1833 = vmatprep.subr.bf16.mxu0 %v1743
        %1834 = vmatpush2.bf16.msra.mxu0 %v1742
        %1835 = vmatprep.subr.bf16.mxu0 %v1739
        %1836 = vmatpush2.bf16.msra.mxu0 %v1738
        %1837 = vmatprep.subr.bf16.mxu0 %v1735
        %1838 = vmatpush2.bf16.msra.mxu0 %v1734
        %1839 = vmatprep.mubr.bf16.mxu0 %v1573
        %1840 = vmatmul.mubr.bf16.gmra.mxu0 %v1572
        %v1841 = vpop.f32.mrf.mxu0
        %v1842 = vadd.f32 %v1801, %v1841
        %v1843 = vpop.f32.mrf.mxu0
        %v1844 = vadd.f32 %v1803, %v1843
        %v1845 = vpop.f32.mrf.mxu0
        %v1846 = vpop.f32.mrf.mxu0
        %1847 = vdwg.mxu0
        %1848 = vmatprep.subr.bf16.mxu0 %v1669
        %1849 = vmatpush1.bf16.msra.mxu0 %v1668
        %1850 = vmatprep.subr.bf16.mxu0 %v1665
        %1851 = vmatpush1.bf16.msra.mxu0 %v1664
        %1852 = vmatprep.subr.bf16.mxu0 %v1661
        %1853 = vmatpush1.bf16.msra.mxu0 %v1660
        %1854 = vmatprep.subr.bf16.mxu0 %v1657
        %1855 = vmatpush1.bf16.msra.mxu0 %v1656
        %1856 = vmatprep.subr.bf16.mxu0 %v1653
        %1857 = vmatpush1.bf16.msra.mxu0 %v1652
        %1858 = vmatprep.subr.bf16.mxu0 %v1649
        %1859 = vmatpush1.bf16.msra.mxu0 %v1648
        %1860 = vmatprep.subr.bf16.mxu0 %v1645
        %1861 = vmatpush1.bf16.msra.mxu0 %v1644
        %1862 = vmatprep.subr.bf16.mxu0 %v1641
        %1863 = vmatpush1.bf16.msra.mxu0 %v1640
        %1864 = vmatprep.subr.bf16.mxu0 %v1701
        %1865 = vmatpush2.bf16.msra.mxu0 %v1700
        %1866 = vmatprep.subr.bf16.mxu0 %v1697
        %1867 = vmatpush2.bf16.msra.mxu0 %v1696
        %1868 = vmatprep.subr.bf16.mxu0 %v1693
        %1869 = vmatpush2.bf16.msra.mxu0 %v1692
        %1870 = vmatprep.subr.bf16.mxu0 %v1689
        %1871 = vmatpush2.bf16.msra.mxu0 %v1688
        %1872 = vmatprep.subr.bf16.mxu0 %v1685
        %1873 = vmatpush2.bf16.msra.mxu0 %v1684
        %1874 = vmatprep.subr.bf16.mxu0 %v1681
        %1875 = vmatpush2.bf16.msra.mxu0 %v1680
        %1876 = vmatprep.subr.bf16.mxu0 %v1677
        %1877 = vmatpush2.bf16.msra.mxu0 %v1676
        %1878 = vmatprep.subr.bf16.mxu0 %v1673
        %1879 = vmatpush2.bf16.msra.mxu0 %v1672
        %1880 = vmatprep.mubr.bf16.mxu0 %v1571
        %1881 = vmatmul.mubr.bf16.gmra.mxu0 %v1570
        %v1882 = vpop.f32.mrf.mxu0
        %v1883 = vadd.f32 0.0, %v1882
        %v1884 = vpop.f32.mrf.mxu0
        %v1885 = vadd.f32 0.0, %v1884
        %v1886 = vpop.f32.mrf.mxu0
        %v1887 = vpop.f32.mrf.mxu0
        %1888 = vdwg.mxu0
        %1889 = vmatprep.subr.bf16.mxu0 %v1733
        %1890 = vmatpush1.bf16.msra.mxu0 %v1732
        %1891 = vmatprep.subr.bf16.mxu0 %v1729
        %1892 = vmatpush1.bf16.msra.mxu0 %v1728
        %1893 = vmatprep.subr.bf16.mxu0 %v1725
        %1894 = vmatpush1.bf16.msra.mxu0 %v1724
        %1895 = vmatprep.subr.bf16.mxu0 %v1721
        %1896 = vmatpush1.bf16.msra.mxu0 %v1720
        %1897 = vmatprep.subr.bf16.mxu0 %v1717
        %1898 = vmatpush1.bf16.msra.mxu0 %v1716
        %1899 = vmatprep.subr.bf16.mxu0 %v1713
        %1900 = vmatpush1.bf16.msra.mxu0 %v1712
        %1901 = vmatprep.subr.bf16.mxu0 %v1709
        %1902 = vmatpush1.bf16.msra.mxu0 %v1708
        %1903 = vmatprep.subr.bf16.mxu0 %v1705
        %1904 = vmatpush1.bf16.msra.mxu0 %v1704
        %1905 = vmatprep.subr.bf16.mxu0 %v1765
        %1906 = vmatpush2.bf16.msra.mxu0 %v1764
        %1907 = vmatprep.subr.bf16.mxu0 %v1761
        %1908 = vmatpush2.bf16.msra.mxu0 %v1760
        %1909 = vmatprep.subr.bf16.mxu0 %v1757
        %1910 = vmatpush2.bf16.msra.mxu0 %v1756
        %1911 = vmatprep.subr.bf16.mxu0 %v1753
        %1912 = vmatpush2.bf16.msra.mxu0 %v1752
        %1913 = vmatprep.subr.bf16.mxu0 %v1749
        %1914 = vmatpush2.bf16.msra.mxu0 %v1748
        %1915 = vmatprep.subr.bf16.mxu0 %v1745
        %1916 = vmatpush2.bf16.msra.mxu0 %v1744
        %1917 = vmatprep.subr.bf16.mxu0 %v1741
        %1918 = vmatpush2.bf16.msra.mxu0 %v1740
        %1919 = vmatprep.subr.bf16.mxu0 %v1737
        %1920 = vmatpush2.bf16.msra.mxu0 %v1736
        %1921 = vmatprep.mubr.bf16.mxu0 %v1573
        %1922 = vmatmul.mubr.bf16.gmra.mxu0 %v1572
        %v1923 = vpop.f32.mrf.mxu0
        %v1924 = vadd.f32 %v1883, %v1923
        %v1925 = vpop.f32.mrf.mxu0
        %v1926 = vadd.f32 %v1885, %v1925
        %v1927 = vpop.f32.mrf.mxu0
        %v1928 = vpop.f32.mrf.mxu0
        %1929 = vdwg.mxu0
        %v1930 = vld [vmem:[%s482] sm:$0xf]
        %v1932 = vlaneseq
        %v1933 = vshrl.u32 %v1932, 7
        %v1934 = vsub.s32 0, %v1933
        %v1935 = vrot.slane %v1930, %v1934
        %v1936 = vlaneseq
        %v1937 = vshrl.u32 %v1936, 7
        %v1938 = vsub.s32 1, %v1937
        %v1939 = vrot.slane %v1930, %v1938
        %v1940 = vlaneseq
        %v1941 = vshrl.u32 %v1940, 7
        %v1942 = vsub.s32 2, %v1941
        %v1943 = vrot.slane %v1930, %v1942
        %v1944 = vlaneseq
        %v1945 = vshrl.u32 %v1944, 7
        %v1946 = vsub.s32 3, %v1945
        %v1947 = vrot.slane %v1930, %v1946
        %v1952 = vmul.f32 %v1842, %v1935
        %v1953 = vmul.f32 %v1844, %v1939
        %v1954 = vmul.f32 %v1924, %v1943
        %v1955 = vmul.f32 %v1926, %v1947
        %v1956 = vld [vmem:[%s487] sm:$0xf]
        %v1958 = vlaneseq
        %v1959 = vshrl.u32 %v1958, 7
        %v1960 = vsub.s32 0, %v1959
        %v1961 = vrot.slane %v1956, %v1960
        %v1962 = vlaneseq
        %v1963 = vshrl.u32 %v1962, 7
        %v1964 = vsub.s32 1, %v1963
        %v1965 = vrot.slane %v1956, %v1964
        %v1966 = vlaneseq
        %v1967 = vshrl.u32 %v1966, 7
        %v1968 = vsub.s32 2, %v1967
        %v1969 = vrot.slane %v1956, %v1968
        %v1970 = vlaneseq
        %v1971 = vshrl.u32 %v1970, 7
        %v1972 = vsub.s32 3, %v1971
        %v1973 = vrot.slane %v1956, %v1972
        %v1978 = vadd.f32 %v1952, %v1961
        %v1979 = vadd.f32 %v1953, %v1965
        %v1980 = vadd.f32 %v1954, %v1969
        %v1981 = vadd.f32 %v1955, %v1973
        %v1986 = vcombine.low %v1978, %v1979
        %v1987 = vcombine.low %v1980, %v1981
        %v1989 = vunpack.c.l.s4 1983009808
        %v1990 = vunpack.c.0.s8 %v1989
        %v1991 = vlaneseq
        %v1992 = vshrl.u32 %v1991, 7
        %v1993 = vsub.s32 %v1990, %v1992
        %v1994 = vrot.slane %v1986, %v1993
        %v1996 = vunpack.c.l.s4 1983009808
        %v1997 = vunpack.c.0.s8 %v1996
        %v1998 = vlaneseq
        %v1999 = vshrl.u32 %v1998, 7
        %v2000 = vsub.s32 %v1997, %v1999
        %v2001 = vrot.slane %v1987, %v2000
        %v2002 = vcombine.low %v1994, %v2001
        %2004 = vst [vmem:[%s477] sm:$0xff] %v2002
        %s2005 = sand.u32 %s213, 1
        %s2006 = scalar_lea.sflag [#allocation4], %s2005
        %s2007 = sand.u32 %s213, 1
        %s2008 = smul.addr %s2007, 8
        %s2009 = scalar_lea.vmem [#allocation3], %s2008
        // Predicated region
        $region76: #{face_model_forward.1} parent=70 // pred_check
          %p2010 = pneg %p223
        $region77: #{face_model_forward.1} parent=70 // pred_check_branch
          %2012 = sbr.rel (%p2010) target = $region79
        $region78: #{face_model_forward.1} parent=70 // pred_region
          %s2013 = smul.u32 4, %s22
          %s2015 = ssub.s32 128, 128
          %2016 = vsyncadd %s2006, %s2015
          %s2017 = smul.addr %s2013, 32
          %s2018 = scalar_lea.hbm %s8, %s2017
          %s2020 = sshll.u32 %s2009, 4
          %s2021 = int_to_ptr.vmem [resolvable:$true] %s2020
          %2023 = dma.vmem_to_hbm [thread:$0]  %s2021, 128, %s2018, %s2006
        $region79: #{face_model_forward.1} parent=70 // pred_fallthru
          _
      $region71: #{face_model_forward.1} parent=5 // pred_fallthru
        _
      %p2024 = scmp.le.s32.totalorder 2, %s17
      // Predicated region
      $region80: #{face_model_forward.1} parent=5 // pred_check
        %p2025 = pneg %p2024
      $region81: #{face_model_forward.1} parent=5 // pred_check_branch
        %2027 = sbr.rel (%p2025) target = $region83
      $region82: #{face_model_forward.1} parent=5 // pred_region
        %s2028 = ssub.s32 %s17, 2
        // Predicated region
        $region84: #{face_model_forward.1} parent=82 // pred_check
          %p2029 = pneg %p229
        $region85: #{face_model_forward.1} parent=82 // pred_check_branch
          %2031 = sbr.rel (%p2029) target = $region87
        $region86: #{face_model_forward.1} parent=82 // pred_region
          %s2032 = sand.u32 %s214, 1
          %s2033 = scalar_lea.sflag [#allocation4], %s2032
          %s2034 = sand.u32 %s214, 1
          %s2035 = smul.addr %s2034, 8
          %s2036 = scalar_lea.vmem [#allocation3], %s2035
          %2037 = dma.done %s2033, 128
        $region87: #{face_model_forward.1} parent=82 // pred_fallthru
          _
      $region83: #{face_model_forward.1} parent=5 // pred_fallthru
        _
    $region6: #{face_model_forward.1} parent=1 // loop_footer
      %s21 = sadd.s32 1, %s17
    $region7: #{face_model_forward.1} parent=1 // loop_footer_branch
      %16 = sbr.rel target = $region3
    $region8: #{face_model_forward.1} parent=1 // loop_exit
      _
    %2038 = vsyncpa [#allocation4], 1
    %s2039 = scalar_lea.sflag [#allocation4], 1
    %2040 = vsyncpa %s2039, 1

</llo_original>
